<compile_context>
chip_gen: v7x
topology: tpu7x:2x2x1
jax: 0.10.0
libtpu: 0.0.40
codegen_flags: <defaults>
</compile_context>

<pallas_src>
import functools

import jax
import jax.numpy as jnp
import numpy as np
from jax import lax
from jax.experimental import pallas as pl
from jax.experimental.pallas import tpu as pltpu


# --------------------------- in-kernel helpers ------------------------------
def _l2_normalize_rows(v):
    # v * rsqrt(||v||^2 + tiny): the transcendental goes to the EUP slot and the
    # [B,D] divide becomes a per-row scalar multiply.  All-zero rows (batch
    # padding) map exactly to zero.
    return v * lax.rsqrt(jnp.sum(v * v, axis=1, keepdims=True) + 1e-16)


def _softmax_logsoftmax(logits):
    """Exact softmax + log_softmax along axis=1 (KL weights -> keep accurate)."""
    m = jnp.max(logits, axis=1, keepdims=True)
    e = jnp.exp(logits - m)
    s = jnp.sum(e, axis=1, keepdims=True)
    return e / s, (logits - m) - jnp.log(s)


def _softmax_approx(logits):
    """Softmax with approximate EUP reciprocal; used inside the power iteration
    where only the gradient *direction* matters."""
    m = jnp.max(logits, axis=1, keepdims=True)
    e = jnp.exp(logits - m)
    s = jnp.sum(e, axis=1, keepdims=True)
    return e * pl.reciprocal(s, approx=True)


def _log_softmax(logits):
    m = jnp.max(logits, axis=1, keepdims=True)
    s = jnp.sum(jnp.exp(logits - m), axis=1, keepdims=True)
    return (logits - m) - jnp.log(s)


# ------------------------------- kernel -------------------------------------
def vat_loss_kernel(x_ref, d_ref, wt_ref, w_ref, b_ref, out_ref,
                    *, xi, eps, ip, batch):
    """Processes one row-tile of the batch; accumulates batchmean KL into out."""
    cdt = x_ref.dtype                       # MXU compute dtype (bf16 or f32)

    @pl.when(pl.program_id(0) == 0)
    def _init():
        out_ref[...] = jnp.zeros_like(out_ref)

    x = x_ref[...]                          # [TB, D]  compute dtype
    wt = wt_ref[...]                        # [D, K]   compute dtype (W^T)
    w = w_ref[...]                          # [K, D]   compute dtype
    b = b_ref[...]                          # [1, K]   f32

    # --- clean prediction: softmax(net(x)), constant target (no_grad) -------
    logits = jnp.dot(x, wt, preferred_element_type=jnp.float32) + b   # [TB, K]
    pred, log_pred = _softmax_logsoftmax(logits)

    # --- random direction, l2-normalized per sample --------------------------
    d = _l2_normalize_rows(d_ref[...].astype(jnp.float32))            # [TB, D]

    # --- power iteration ------------------------------------------------------
    # net is affine => net(x + a*d) = logits + a * (d @ W^T); reuse clean logits.
    # Analytic grad of KL(pred || softmax(logits_hat)) (batchmean) w.r.t. d is
    #   (xi / B) * (softmax(logits_hat) - pred) @ W ;
    # positive scalars xi and 1/B are erased by the l2 normalization -> dropped.
    # ip is a small static int -> keep the Python unroll.
    for _ in range(ip):
        d_logits = jnp.dot(d.astype(cdt), wt, preferred_element_type=jnp.float32)
        p_hat = _softmax_approx(logits + xi * d_logits)
        g_logits = (p_hat - pred).astype(cdt)                         # [TB, K]
        g_d = jnp.dot(g_logits, w, preferred_element_type=jnp.float32)  # [TB, D]
        d = _l2_normalize_rows(g_d)

    # --- LDS = KL(pred || softmax(net(x + eps*d))), reduction='batchmean' ----
    d_logits = jnp.dot(d.astype(cdt), wt, preferred_element_type=jnp.float32)
    logp_hat = _log_softmax(logits + eps * d_logits)
    kl_rows = jnp.sum(pred * (log_pred - logp_hat), axis=1, keepdims=True)  # [TB,1]
    out_ref[...] += jnp.sum(kl_rows, axis=0, keepdims=True) * (1.0 / batch)


# ------------------------------- wrapper -------------------------------------
def vat_loss(x_flat, w, b, d0_flat, *, xi=10.0, eps=10.0, ip=1,
             compute_dtype=jnp.bfloat16, block_b=None):
    assert xi > 0.0 and eps > 0.0   # scale-dropping inside the kernel needs xi>0
    batch, dim = x_flat.shape
    k = w.shape[0]

    # Pad the batch to a multiple of 8 sublanes (and of the row tile).
    # Padded rows are zero for both x and d, so their KL contribution is
    # exactly zero (zero d stays zero through rsqrt-normalization & matmuls).
    if block_b is None:
        block_b = min(max(8, -(-batch // 8) * 8), 128)
    bp = -(-batch // block_b) * block_b
    pad = bp - batch

    xp = jnp.pad(x_flat, ((0, pad), (0, 0))).astype(compute_dtype)
    dp = jnp.pad(d0_flat, ((0, pad), (0, 0))).astype(compute_dtype)
    w_c = w.astype(compute_dtype)        # [K, D]  gradient matmul
    w_t = w.T.astype(compute_dtype)      # [D, K]  forward matmuls (no in-kernel T)
    b32 = b.astype(jnp.float32)

    kernel = functools.partial(vat_loss_kernel, xi=float(xi), eps=float(eps),
                               ip=int(ip), batch=int(batch))
    out = pl.pallas_call(
        kernel,
        out_shape=jax.ShapeDtypeStruct((1, 1), jnp.float32),
        grid=(bp // block_b,),
        in_specs=[
            pl.BlockSpec((block_b, dim), lambda i: (i, 0)),  # x row tile
            pl.BlockSpec((block_b, dim), lambda i: (i, 0)),  # d row tile
            pl.BlockSpec((dim, k), lambda i: (0, 0)),        # W^T (resident)
            pl.BlockSpec((k, dim), lambda i: (0, 0)),        # W   (resident)
            pl.BlockSpec((1, k), lambda i: (0, 0)),          # bias (resident)
        ],
        out_specs=pl.BlockSpec((1, 1), lambda i: (0, 0)),    # scalar accumulator
        compiler_params=pltpu.CompilerParams(
            dimension_semantics=("arbitrary",)),              # reduction axis
    )(xp, dp, w_t, w_c, b32)
    return out[0, 0]


# --------------------------- pure-JAX reference ------------------------------
def _net(x_flat, w, b):
    return x_flat @ w.T + b


def vat_loss_ref(x_flat, w, b, d0_flat, *, xi=10.0, eps=10.0, ip=1):
    batch = x_flat.shape[0]
    pred = jax.nn.softmax(_net(x_flat, w, b), axis=1)

    def kl(d):
        logp_hat = jax.nn.log_softmax(_net(x_flat + xi * d, w, b), axis=1)
        return jnp.sum(pred * (jnp.log(pred) - logp_hat)) / batch

    d = d0_flat / (jnp.linalg.norm(d0_flat, axis=1, keepdims=True) + 1e-8)
    for _ in range(ip):
        g = jax.grad(kl)(d)
        d = g / (jnp.linalg.norm(g, axis=1, keepdims=True) + 1e-8)
    logp_hat = jax.nn.log_softmax(_net(x_flat + eps * d, w, b), axis=1)
    return jnp.sum(pred * (jnp.log(pred) - logp_hat)) / batch


if __name__ == "__main__":
    B, C, H, W_sp, K = 2, 4, 16, 16, 8
    D = C * H * W_sp
    xi, eps, ip = 10.0, 10.0, 1

    key = jax.random.PRNGKey(0)
    kx, kw, kb, kd = jax.random.split(key, 4)

    x = jax.random.normal(kx, (B, C, H, W_sp), jnp.float32)
    w = jax.random.normal(kw, (K, D), jnp.float32) * 0.05
    b = jax.random.normal(kb, (1, K), jnp.float32) * 0.1
    d0 = jax.random.uniform(kd, (B, C, H, W_sp), jnp.float32) - 0.5   # rand-0.5

    x_flat = x.reshape(B, D)
    d0_flat = d0.reshape(B, D)

    ref = vat_loss_ref(x_flat, w, b, d0_flat, xi=xi, eps=eps, ip=ip)

    # f32 compute path: tight-ish check (only approx-reciprocal / summation
    # order / scale-drop rounding differ from the pure-JAX reference).
    lds_f32 = vat_loss(x_flat, w, b, d0_flat, xi=xi, eps=eps, ip=ip,
                       compute_dtype=jnp.float32)
    jax.block_until_ready(lds_f32)
    assert np.allclose(np.asarray(lds_f32), np.asarray(ref),
                       rtol=5e-2, atol=1e-4), (float(lds_f32), float(ref))

    # bf16 MXU path (default): loose sanity band — bf16 rounding perturbs the
    # adversarial direction, which the loss amplifies, so exact agreement with
    # the f32 reference is not expected.
    lds_bf16 = vat_loss(x_flat, w, b, d0_flat, xi=xi, eps=eps, ip=ip,
                        compute_dtype=jnp.bfloat16)
    jax.block_until_ready(lds_bf16)
    assert np.isfinite(float(lds_bf16)), float(lds_bf16)
    assert np.allclose(np.asarray(lds_bf16), np.asarray(ref),
                       rtol=2.5e-1, atol=5e-2), (float(lds_bf16), float(ref))

    print("KERNEL_OK")
</pallas_src>

<mosaic_0001>
module attributes {stable_mosaic.version = 11 : i64} {
  func.func @vat_loss_kernel(%arg0: i32, %arg1: memref<8x1024xf32, #tpu.memory_space<vmem>>, %arg2: memref<8x1024xf32, #tpu.memory_space<vmem>>, %arg3: memref<1024x8xf32, #tpu.memory_space<vmem>>, %arg4: memref<8x1024xf32, #tpu.memory_space<vmem>>, %arg5: memref<1x8xf32, #tpu.memory_space<vmem>>, %arg6: memref<1x1xf32, #tpu.memory_space<vmem>>) attributes {dimension_semantics = [#tpu.dimension_semantics<arbitrary>], iteration_bounds = array<i64: 1>, scalar_prefetch = 0 : i64, scratch_operands = 0 : i64, tpu.core_type = #tpu.core_type<tc>, window_params = [{transform_indices = @transform_0, window_bounds = array<i64: 8, 1024>}, {transform_indices = @transform_1, window_bounds = array<i64: 8, 1024>}, {pipeline_mode = #tpu.pipeline_mode<synchronous>, transform_indices = @transform_2, window_bounds = array<i64: 1024, 8>}, {pipeline_mode = #tpu.pipeline_mode<synchronous>, transform_indices = @transform_3, window_bounds = array<i64: 8, 1024>}, {pipeline_mode = #tpu.pipeline_mode<synchronous>, transform_indices = @transform_4, window_bounds = array<i64: 1, 8>}, {pipeline_mode = #tpu.pipeline_mode<synchronous>, transform_indices = @transform_5, window_bounds = array<i64: 1, 1>}]} {
    %c0_i32 = arith.constant 0 : i32
    %0 = arith.cmpi eq, %arg0, %c0_i32 : i32
    %1 = arith.extui %0 : i1 to i32
    %c0_i32_0 = arith.constant 0 : i32
    %2 = arith.cmpi ne, %1, %c0_i32_0 : i32
    scf.if %2 {
      %cst_32 = arith.constant 0.000000e+00 : f32
      %84 = vector.broadcast %cst_32 : f32 to vector<1x1xf32>
      %c0_33 = arith.constant 0 : index
      %c0_34 = arith.constant 0 : index
      %85 = vector.load %arg6[%c0_33, %c0_34] : memref<1x1xf32, #tpu.memory_space<vmem>>, vector<1x1xf32>
      tpu.vector_store %arg6[%c0_33, %c0_34], %84 {strides = array<i32>} : memref<1x1xf32, #tpu.memory_space<vmem>>, vector<1x1xf32>,
    } else {
    }
    %c0 = arith.constant 0 : index
    %c0_1 = arith.constant 0 : index
    %3 = vector.load %arg1[%c0, %c0_1] : memref<8x1024xf32, #tpu.memory_space<vmem>>, vector<8x1024xf32>
    %c0_2 = arith.constant 0 : index
    %c0_3 = arith.constant 0 : index
    %4 = vector.load %arg3[%c0_2, %c0_3] : memref<1024x8xf32, #tpu.memory_space<vmem>>, vector<1024x8xf32>
    %c0_4 = arith.constant 0 : index
    %c0_5 = arith.constant 0 : index
    %5 = vector.load %arg4[%c0_4, %c0_5] : memref<8x1024xf32, #tpu.memory_space<vmem>>, vector<8x1024xf32>
    %c0_6 = arith.constant 0 : index
    %c0_7 = arith.constant 0 : index
    %6 = vector.load %arg5[%c0_6, %c0_7] : memref<1x8xf32, #tpu.memory_space<vmem>>, vector<1x8xf32>
    %cst = arith.constant dense<0.000000e+00> : vector<8x8xf32>
    %7 = tpu.matmul %3, %4, %cst {dimension_numbers = #tpu.dot_dimension_numbers<[1], [0], [0], [1], [0, 0, 1, 1], [], []>} : vector<8x1024xf32>, vector<1024x8xf32>, vector<8x8xf32> -> vector<8x8xf32>
    %8 = vector.broadcast %6 : vector<1x8xf32> to vector<8x8xf32>
    %9 = arith.addf %7, %8 : vector<8x8xf32>
    %cst_8 = arith.constant dense<0xFF800000> : vector<8xf32>
    %10 = vector.multi_reduction <maximumf>, %9, %cst_8 [1] : vector<8x8xf32> to vector<8xf32>
    %11 = vector.shape_cast %10 : vector<8xf32> to vector<8x1xf32>
    %12 = vector.broadcast %11 : vector<8x1xf32> to vector<8x8xf32>
    %13 = arith.subf %9, %12 : vector<8x8xf32>
    %14 = math.exp %13 : vector<8x8xf32>
    %cst_9 = arith.constant dense<0.000000e+00> : vector<8xf32>
    %15 = vector.multi_reduction <add>, %14, %cst_9 [1] : vector<8x8xf32> to vector<8xf32>
    %16 = vector.shape_cast %15 : vector<8xf32> to vector<8x1xf32>
    %17 = vector.broadcast %16 : vector<8x1xf32> to vector<8x8xf32>
    %18 = arith.divf %14, %17 : vector<8x8xf32>
    %19 = vector.broadcast %11 : vector<8x1xf32> to vector<8x8xf32>
    %20 = arith.subf %9, %19 : vector<8x8xf32>
    %21 = math.log %16 : vector<8x1xf32>
    %22 = vector.broadcast %21 : vector<8x1xf32> to vector<8x8xf32>
    %23 = arith.subf %20, %22 : vector<8x8xf32>
    %c0_10 = arith.constant 0 : index
    %c0_11 = arith.constant 0 : index
    %24 = vector.load %arg2[%c0_10, %c0_11] : memref<8x1024xf32, #tpu.memory_space<vmem>>, vector<8x1024xf32>
    %25 = arith.mulf %24, %24 : vector<8x1024xf32>
    %cst_12 = arith.constant dense<0.000000e+00> : vector<8xf32>
    %26 = vector.multi_reduction <add>, %25, %cst_12 [1] : vector<8x1024xf32> to vector<8xf32>
    %27 = vector.shape_cast %26 : vector<8xf32> to vector<8x1xf32>
    %cst_13 = arith.constant 1.000000e-16 : f32
    %28 = vector.broadcast %cst_13 : f32 to vector<8x1xf32>
    %29 = arith.addf %27, %28 : vector<8x1xf32>
    %30 = math.rsqrt %29 : vector<8x1xf32>
    %31 = vector.broadcast %30 : vector<8x1xf32> to vector<8x1024xf32>
    %32 = arith.mulf %24, %31 : vector<8x1024xf32>
    %cst_14 = arith.constant dense<0.000000e+00> : vector<8x8xf32>
    %33 = tpu.matmul %32, %4, %cst_14 {dimension_numbers = #tpu.dot_dimension_numbers<[1], [0], [0], [1], [0, 0, 1, 1], [], []>} : vector<8x1024xf32>, vector<1024x8xf32>, vector<8x8xf32> -> vector<8x8xf32>
    %cst_15 = arith.constant 1.000000e+01 : f32
    %34 = vector.broadcast %cst_15 : f32 to vector<8x8xf32>
    %35 = arith.mulf %34, %33 : vector<8x8xf32>
    %36 = arith.addf %9, %35 : vector<8x8xf32>
    %cst_16 = arith.constant dense<0xFF800000> : vector<8xf32>
    %37 = vector.multi_reduction <maximumf>, %36, %cst_16 [1] : vector<8x8xf32> to vector<8xf32>
    %38 = vector.shape_cast %37 : vector<8xf32> to vector<8x1xf32>
    %39 = vector.broadcast %38 : vector<8x1xf32> to vector<8x8xf32>
    %40 = arith.subf %36, %39 : vector<8x8xf32>
    %41 = math.exp %40 : vector<8x8xf32>
    %cst_17 = arith.constant dense<0.000000e+00> : vector<8xf32>
    %42 = vector.multi_reduction <add>, %41, %cst_17 [1] : vector<8x8xf32> to vector<8xf32>
    %43 = vector.shape_cast %42 : vector<8xf32> to vector<8x1xf32>
    %44 = tpu.reciprocal %43 {approx = true} : vector<8x1xf32> -> vector<8x1xf32>
    %45 = vector.broadcast %44 : vector<8x1xf32> to vector<8x8xf32>
    %46 = arith.mulf %41, %45 : vector<8x8xf32>
    %47 = arith.subf %46, %18 : vector<8x8xf32>
    %cst_18 = arith.constant dense<0.000000e+00> : vector<8x1024xf32>
    %48 = tpu.matmul %47, %5, %cst_18 {dimension_numbers = #tpu.dot_dimension_numbers<[1], [0], [0], [1], [0, 0, 1, 1], [], []>} : vector<8x8xf32>, vector<8x1024xf32>, vector<8x1024xf32> -> vector<8x1024xf32>
    %49 = arith.mulf %48, %48 : vector<8x1024xf32>
    %cst_19 = arith.constant dense<0.000000e+00> : vector<8xf32>
    %50 = vector.multi_reduction <add>, %49, %cst_19 [1] : vector<8x1024xf32> to vector<8xf32>
    %51 = vector.shape_cast %50 : vector<8xf32> to vector<8x1xf32>
    %cst_20 = arith.constant 1.000000e-16 : f32
    %52 = vector.broadcast %cst_20 : f32 to vector<8x1xf32>
    %53 = arith.addf %51, %52 : vector<8x1xf32>
    %54 = math.rsqrt %53 : vector<8x1xf32>
    %55 = vector.broadcast %54 : vector<8x1xf32> to vector<8x1024xf32>
    %56 = arith.mulf %48, %55 : vector<8x1024xf32>
    %cst_21 = arith.constant dense<0.000000e+00> : vector<8x8xf32>
    %57 = tpu.matmul %56, %4, %cst_21 {dimension_numbers = #tpu.dot_dimension_numbers<[1], [0], [0], [1], [0, 0, 1, 1], [], []>} : vector<8x1024xf32>, vector<1024x8xf32>, vector<8x8xf32> -> vector<8x8xf32>
    %cst_22 = arith.constant 1.000000e+01 : f32
    %58 = vector.broadcast %cst_22 : f32 to vector<8x8xf32>
    %59 = arith.mulf %58, %57 : vector<8x8xf32>
    %60 = arith.addf %9, %59 : vector<8x8xf32>
    %cst_23 = arith.constant dense<0xFF800000> : vector<8xf32>
    %61 = vector.multi_reduction <maximumf>, %60, %cst_23 [1] : vector<8x8xf32> to vector<8xf32>
    %62 = vector.shape_cast %61 : vector<8xf32> to vector<8x1xf32>
    %63 = vector.broadcast %62 : vector<8x1xf32> to vector<8x8xf32>
    %64 = arith.subf %60, %63 : vector<8x8xf32>
    %65 = math.exp %64 : vector<8x8xf32>
    %cst_24 = arith.constant dense<0.000000e+00> : vector<8xf32>
    %66 = vector.multi_reduction <add>, %65, %cst_24 [1] : vector<8x8xf32> to vector<8xf32>
    %67 = vector.shape_cast %66 : vector<8xf32> to vector<8x1xf32>
    %68 = vector.broadcast %62 : vector<8x1xf32> to vector<8x8xf32>
    %69 = arith.subf %60, %68 : vector<8x8xf32>
    %70 = math.log %67 : vector<8x1xf32>
    %71 = vector.broadcast %70 : vector<8x1xf32> to vector<8x8xf32>
    %72 = arith.subf %69, %71 : vector<8x8xf32>
    %73 = arith.subf %23, %72 : vector<8x8xf32>
    %74 = arith.mulf %18, %73 : vector<8x8xf32>
    %cst_25 = arith.constant dense<0.000000e+00> : vector<8xf32>
    %75 = vector.multi_reduction <add>, %74, %cst_25 [1] : vector<8x8xf32> to vector<8xf32>
    %76 = vector.shape_cast %75 : vector<8xf32> to vector<8x1xf32>
    %c0_26 = arith.constant 0 : index
    %c0_27 = arith.constant 0 : index
    %77 = vector.load %arg6[%c0_26, %c0_27] : memref<1x1xf32, #tpu.memory_space<vmem>>, vector<1x1xf32>
    %cst_28 = arith.constant dense<0.000000e+00> : vector<1xf32>
    %78 = vector.multi_reduction <add>, %76, %cst_28 [0] : vector<8x1xf32> to vector<1xf32>
    %79 = vector.shape_cast %78 : vector<1xf32> to vector<1x1xf32>
    %cst_29 = arith.constant 5.000000e-01 : f32
    %80 = vector.broadcast %cst_29 : f32 to vector<1x1xf32>
    %81 = arith.mulf %79, %80 : vector<1x1xf32>
    %82 = arith.addf %77, %81 : vector<1x1xf32>
    %c0_30 = arith.constant 0 : index
    %c0_31 = arith.constant 0 : index
    %83 = vector.load %arg6[%c0_30, %c0_31] : memref<1x1xf32, #tpu.memory_space<vmem>>, vector<1x1xf32>
    tpu.vector_store %arg6[%c0_30, %c0_31], %82 {strides = array<i32>} : memref<1x1xf32, #tpu.memory_space<vmem>>, vector<1x1xf32>,
    return
  }
  func.func @transform_0(%arg0: i32) -> (i32, i32) {
    %c0_i32 = arith.constant 0 : i32
    %c0_i32_0 = arith.constant 0 : i32
    return %arg0, %c0_i32 : i32, i32
  }
  func.func @transform_1(%arg0: i32) -> (i32, i32) {
    %c0_i32 = arith.constant 0 : i32
    %c0_i32_0 = arith.constant 0 : i32
    return %arg0, %c0_i32 : i32, i32
  }
  func.func @transform_2(%arg0: i32) -> (i32, i32) {
    %c0_i32 = arith.constant 0 : i32
    %c0_i32_0 = arith.constant 0 : i32
    %c0_i32_1 = arith.constant 0 : i32
    return %c0_i32, %c0_i32_0 : i32, i32
  }
  func.func @transform_3(%arg0: i32) -> (i32, i32) {
    %c0_i32 = arith.constant 0 : i32
    %c0_i32_0 = arith.constant 0 : i32
    %c0_i32_1 = arith.constant 0 : i32
    return %c0_i32, %c0_i32_0 : i32, i32
  }
  func.func @transform_4(%arg0: i32) -> (i32, i32) {
    %c0_i32 = arith.constant 0 : i32
    %c0_i32_0 = arith.constant 0 : i32
    %c0_i32_1 = arith.constant 0 : i32
    return %c0_i32, %c0_i32_0 : i32, i32
  }
  func.func @transform_5(%arg0: i32) -> (i32, i32) {
    %c0_i32 = arith.constant 0 : i32
    %c0_i32_0 = arith.constant 0 : i32
    %c0_i32_1 = arith.constant 0 : i32
    return %c0_i32, %c0_i32_0 : i32, i32
  }
}

</mosaic_0001>

<llo_original>
// kernel: tpu_custom_call.1
$region0: #{tpu_custom_call.1}
  #allocation0 [shape = 'u32[]', space=smem, size = 0x4, offset = 0x4, fixed_abs, tag = 'smem constant byte address 0x4 - core index']
  #allocation1 [shape = 'u32[144,128]{1,0:T(1,128)}', space=vmem, size = 0x12000, scoped, tag = 'internal scratch']
  %s0 = inlined_call_operand.vmem [shape: f32[8,1024], index: 0, kind: input, shape index: {}]
  %s1 = inlined_call_operand.vmem [shape: f32[8,1024], index: 1, kind: input, shape index: {}]
  %s2 = inlined_call_operand.vmem [shape: f32[1024,8], index: 2, kind: input, shape index: {}]
  %s3 = inlined_call_operand.vmem [shape: f32[8,1024], index: 3, kind: input, shape index: {}]
  %s4 = inlined_call_operand.vmem [shape: f32[1,8], index: 4, kind: input, shape index: {}]
  %s5 = inlined_call_operand.hbm [shape: f32[1,1], index: 5, kind: output, shape index: {}]
  %s6 = sld [smem:[#allocation0]]
  $region34: #{tpu_custom_call.1} parent=0
    _
  %s8 = ssub.s32 1, %s6
  %s9 = scalar_select 0, %s8, %s6
  $region1: #{tpu_custom_call.1} parent=0
    #allocation2 [shape = 'u8[512]{0}', space=vmem, size = 0x400, scoped, tag = 'output window, operand 0, single buffered']
    #allocation3 [shape = 's32[1]{0}', space=sflag, size = 0x4, scoped, tag = 'scoped memory for tpu_custom_call.1']
    %10 = vsyncpa [#allocation3], 0
    // Predicated region
    $region2: #{tpu_custom_call.1} parent=1 // pred_check
      _
    $region3: #{tpu_custom_call.1} parent=1 // pred_check_branch
      %12 = sbr.rel (0) target = $region5
    $region4: #{tpu_custom_call.1} parent=1 // pred_region
      _
    $region5: #{tpu_custom_call.1} parent=1 // pred_fallthru
      _
    // Predicated region
    $region6: #{tpu_custom_call.1} parent=1 // pred_check
      _
    $region7: #{tpu_custom_call.1} parent=1 // pred_check_branch
      %14 = sbr.rel (0) target = $region9
    $region8: #{tpu_custom_call.1} parent=1 // pred_region
      _
    $region9: #{tpu_custom_call.1} parent=1 // pred_fallthru
      _
    // Predicated region
    $region10: #{tpu_custom_call.1} parent=1 // pred_check
      _
    $region11: #{tpu_custom_call.1} parent=1 // pred_check_branch
      %16 = sbr.rel (0) target = $region13
    $region12: #{tpu_custom_call.1} parent=1 // pred_region
      _
    $region13: #{tpu_custom_call.1} parent=1 // pred_fallthru
      _
    // Predicated region
    $region14: #{tpu_custom_call.1} parent=1 // pred_check
      _
    $region15: #{tpu_custom_call.1} parent=1 // pred_check_branch
      %18 = sbr.rel (0) target = $region17
    $region16: #{tpu_custom_call.1} parent=1 // pred_region
      _
    $region17: #{tpu_custom_call.1} parent=1 // pred_fallthru
      _
    // Predicated region
    $region18: #{tpu_custom_call.1} parent=1 // pred_check
      _
    $region19: #{tpu_custom_call.1} parent=1 // pred_check_branch
      %20 = sbr.rel (0) target = $region21
    $region20: #{tpu_custom_call.1} parent=1 // pred_region
      _
    $region21: #{tpu_custom_call.1} parent=1 // pred_fallthru
      _
    %p21 = scmp.eq.s32.totalorder 0, 0
    // Predicated region
    $region22: #{tpu_custom_call.1} parent=1 // pred_check
      %p22 = pneg %p21
    $region23: #{tpu_custom_call.1} parent=1 // pred_check_branch
      %24 = sbr.rel (%p22) target = $region25
    $region24: #{tpu_custom_call.1} parent=1 // pred_region
      %vm25 = vcmask 0
      %26 = vst.msk [vmem:[#allocation2] sm:$0x1] %vm25, 0.0
    $region25: #{tpu_custom_call.1} parent=1 // pred_fallthru
      _
    %v27 = vld [vmem:[%s0] sm:$0xff]
    %v28 = vld [vmem:[%s0 + $0x8] sm:$0xff]
    %v29 = vld [vmem:[%s0 + $0x10] sm:$0xff]
    %v30 = vld [vmem:[%s0 + $0x18] sm:$0xff]
    %v31 = vld [vmem:[%s0 + $0x20] sm:$0xff]
    %v32 = vld [vmem:[%s0 + $0x28] sm:$0xff]
    %v33 = vld [vmem:[%s0 + $0x30] sm:$0xff]
    %v34 = vld [vmem:[%s0 + $0x38] sm:$0xff]
    %v35 = vld [vmem:[%s2] sm:$0xff]
    %v36 = vld [vmem:[%s2 + $0x8] sm:$0xff]
    %v37 = vld [vmem:[%s2 + $0x10] sm:$0xff]
    %v38 = vld [vmem:[%s2 + $0x18] sm:$0xff]
    %v39 = vld [vmem:[%s2 + $0x20] sm:$0xff]
    %v40 = vld [vmem:[%s2 + $0x28] sm:$0xff]
    %v41 = vld [vmem:[%s2 + $0x30] sm:$0xff]
    %v42 = vld [vmem:[%s2 + $0x38] sm:$0xff]
    %v43 = vld [vmem:[%s2 + $0x40] sm:$0xff]
    %v44 = vld [vmem:[%s2 + $0x48] sm:$0xff]
    %v45 = vld [vmem:[%s2 + $0x50] sm:$0xff]
    %v46 = vld [vmem:[%s2 + $0x58] sm:$0xff]
    %v47 = vld [vmem:[%s2 + $0x60] sm:$0xff]
    %v48 = vld [vmem:[%s2 + $0x68] sm:$0xff]
    %v49 = vld [vmem:[%s2 + $0x70] sm:$0xff]
    %v50 = vld [vmem:[%s2 + $0x78] sm:$0xff]
    %v51 = vld [vmem:[%s2 + $0x80] sm:$0xff]
    %v52 = vld [vmem:[%s2 + $0x88] sm:$0xff]
    %v53 = vld [vmem:[%s2 + $0x90] sm:$0xff]
    %v54 = vld [vmem:[%s2 + $0x98] sm:$0xff]
    %v55 = vld [vmem:[%s2 + $0xa0] sm:$0xff]
    %v56 = vld [vmem:[%s2 + $0xa8] sm:$0xff]
    %v57 = vld [vmem:[%s2 + $0xb0] sm:$0xff]
    %v58 = vld [vmem:[%s2 + $0xb8] sm:$0xff]
    %v59 = vld [vmem:[%s2 + $0xc0] sm:$0xff]
    %v60 = vld [vmem:[%s2 + $0xc8] sm:$0xff]
    %v61 = vld [vmem:[%s2 + $0xd0] sm:$0xff]
    %v62 = vld [vmem:[%s2 + $0xd8] sm:$0xff]
    %v63 = vld [vmem:[%s2 + $0xe0] sm:$0xff]
    %v64 = vld [vmem:[%s2 + $0xe8] sm:$0xff]
    %v65 = vld [vmem:[%s2 + $0xf0] sm:$0xff]
    %v66 = vld [vmem:[%s2 + $0xf8] sm:$0xff]
    %v67 = vld [vmem:[%s2 + $0x100] sm:$0xff]
    %v68 = vld [vmem:[%s2 + $0x108] sm:$0xff]
    %v69 = vld [vmem:[%s2 + $0x110] sm:$0xff]
    %v70 = vld [vmem:[%s2 + $0x118] sm:$0xff]
    %v71 = vld [vmem:[%s2 + $0x120] sm:$0xff]
    %v72 = vld [vmem:[%s2 + $0x128] sm:$0xff]
    %v73 = vld [vmem:[%s2 + $0x130] sm:$0xff]
    %v74 = vld [vmem:[%s2 + $0x138] sm:$0xff]
    %v75 = vld [vmem:[%s2 + $0x140] sm:$0xff]
    %v76 = vld [vmem:[%s2 + $0x148] sm:$0xff]
    %v77 = vld [vmem:[%s2 + $0x150] sm:$0xff]
    %v78 = vld [vmem:[%s2 + $0x158] sm:$0xff]
    %v79 = vld [vmem:[%s2 + $0x160] sm:$0xff]
    %v80 = vld [vmem:[%s2 + $0x168] sm:$0xff]
    %v81 = vld [vmem:[%s2 + $0x170] sm:$0xff]
    %v82 = vld [vmem:[%s2 + $0x178] sm:$0xff]
    %v83 = vld [vmem:[%s2 + $0x180] sm:$0xff]
    %v84 = vld [vmem:[%s2 + $0x188] sm:$0xff]
    %v85 = vld [vmem:[%s2 + $0x190] sm:$0xff]
    %v86 = vld [vmem:[%s2 + $0x198] sm:$0xff]
    %v87 = vld [vmem:[%s2 + $0x1a0] sm:$0xff]
    %v88 = vld [vmem:[%s2 + $0x1a8] sm:$0xff]
    %v89 = vld [vmem:[%s2 + $0x1b0] sm:$0xff]
    %v90 = vld [vmem:[%s2 + $0x1b8] sm:$0xff]
    %v91 = vld [vmem:[%s2 + $0x1c0] sm:$0xff]
    %v92 = vld [vmem:[%s2 + $0x1c8] sm:$0xff]
    %v93 = vld [vmem:[%s2 + $0x1d0] sm:$0xff]
    %v94 = vld [vmem:[%s2 + $0x1d8] sm:$0xff]
    %v95 = vld [vmem:[%s2 + $0x1e0] sm:$0xff]
    %v96 = vld [vmem:[%s2 + $0x1e8] sm:$0xff]
    %v97 = vld [vmem:[%s2 + $0x1f0] sm:$0xff]
    %v98 = vld [vmem:[%s2 + $0x1f8] sm:$0xff]
    %v99 = vld [vmem:[%s2 + $0x200] sm:$0xff]
    %v100 = vld [vmem:[%s2 + $0x208] sm:$0xff]
    %v101 = vld [vmem:[%s2 + $0x210] sm:$0xff]
    %v102 = vld [vmem:[%s2 + $0x218] sm:$0xff]
    %v103 = vld [vmem:[%s2 + $0x220] sm:$0xff]
    %v104 = vld [vmem:[%s2 + $0x228] sm:$0xff]
    %v105 = vld [vmem:[%s2 + $0x230] sm:$0xff]
    %v106 = vld [vmem:[%s2 + $0x238] sm:$0xff]
    %v107 = vld [vmem:[%s2 + $0x240] sm:$0xff]
    %v108 = vld [vmem:[%s2 + $0x248] sm:$0xff]
    %v109 = vld [vmem:[%s2 + $0x250] sm:$0xff]
    %v110 = vld [vmem:[%s2 + $0x258] sm:$0xff]
    %v111 = vld [vmem:[%s2 + $0x260] sm:$0xff]
    %v112 = vld [vmem:[%s2 + $0x268] sm:$0xff]
    %v113 = vld [vmem:[%s2 + $0x270] sm:$0xff]
    %v114 = vld [vmem:[%s2 + $0x278] sm:$0xff]
    %v115 = vld [vmem:[%s2 + $0x280] sm:$0xff]
    %v116 = vld [vmem:[%s2 + $0x288] sm:$0xff]
    %v117 = vld [vmem:[%s2 + $0x290] sm:$0xff]
    %v118 = vld [vmem:[%s2 + $0x298] sm:$0xff]
    %v119 = vld [vmem:[%s2 + $0x2a0] sm:$0xff]
    %v120 = vld [vmem:[%s2 + $0x2a8] sm:$0xff]
    %v121 = vld [vmem:[%s2 + $0x2b0] sm:$0xff]
    %v122 = vld [vmem:[%s2 + $0x2b8] sm:$0xff]
    %v123 = vld [vmem:[%s2 + $0x2c0] sm:$0xff]
    %v124 = vld [vmem:[%s2 + $0x2c8] sm:$0xff]
    %v125 = vld [vmem:[%s2 + $0x2d0] sm:$0xff]
    %v126 = vld [vmem:[%s2 + $0x2d8] sm:$0xff]
    %v127 = vld [vmem:[%s2 + $0x2e0] sm:$0xff]
    %v128 = vld [vmem:[%s2 + $0x2e8] sm:$0xff]
    %v129 = vld [vmem:[%s2 + $0x2f0] sm:$0xff]
    %v130 = vld [vmem:[%s2 + $0x2f8] sm:$0xff]
    %v131 = vld [vmem:[%s2 + $0x300] sm:$0xff]
    %v132 = vld [vmem:[%s2 + $0x308] sm:$0xff]
    %v133 = vld [vmem:[%s2 + $0x310] sm:$0xff]
    %v134 = vld [vmem:[%s2 + $0x318] sm:$0xff]
    %v135 = vld [vmem:[%s2 + $0x320] sm:$0xff]
    %v136 = vld [vmem:[%s2 + $0x328] sm:$0xff]
    %v137 = vld [vmem:[%s2 + $0x330] sm:$0xff]
    %v138 = vld [vmem:[%s2 + $0x338] sm:$0xff]
    %v139 = vld [vmem:[%s2 + $0x340] sm:$0xff]
    %v140 = vld [vmem:[%s2 + $0x348] sm:$0xff]
    %v141 = vld [vmem:[%s2 + $0x350] sm:$0xff]
    %v142 = vld [vmem:[%s2 + $0x358] sm:$0xff]
    %v143 = vld [vmem:[%s2 + $0x360] sm:$0xff]
    %v144 = vld [vmem:[%s2 + $0x368] sm:$0xff]
    %v145 = vld [vmem:[%s2 + $0x370] sm:$0xff]
    %v146 = vld [vmem:[%s2 + $0x378] sm:$0xff]
    %v147 = vld [vmem:[%s2 + $0x380] sm:$0xff]
    %v148 = vld [vmem:[%s2 + $0x388] sm:$0xff]
    %v149 = vld [vmem:[%s2 + $0x390] sm:$0xff]
    %v150 = vld [vmem:[%s2 + $0x398] sm:$0xff]
    %v151 = vld [vmem:[%s2 + $0x3a0] sm:$0xff]
    %v152 = vld [vmem:[%s2 + $0x3a8] sm:$0xff]
    %v153 = vld [vmem:[%s2 + $0x3b0] sm:$0xff]
    %v154 = vld [vmem:[%s2 + $0x3b8] sm:$0xff]
    %v155 = vld [vmem:[%s2 + $0x3c0] sm:$0xff]
    %v156 = vld [vmem:[%s2 + $0x3c8] sm:$0xff]
    %v157 = vld [vmem:[%s2 + $0x3d0] sm:$0xff]
    %v158 = vld [vmem:[%s2 + $0x3d8] sm:$0xff]
    %v159 = vld [vmem:[%s2 + $0x3e0] sm:$0xff]
    %v160 = vld [vmem:[%s2 + $0x3e8] sm:$0xff]
    %v161 = vld [vmem:[%s2 + $0x3f0] sm:$0xff]
    %v162 = vld [vmem:[%s2 + $0x3f8] sm:$0xff]
    %v163 = vld [vmem:[%s3] sm:$0xff]
    %v164 = vld [vmem:[%s3 + $0x8] sm:$0xff]
    %v165 = vld [vmem:[%s3 + $0x10] sm:$0xff]
    %v166 = vld [vmem:[%s3 + $0x18] sm:$0xff]
    %v167 = vld [vmem:[%s3 + $0x20] sm:$0xff]
    %v168 = vld [vmem:[%s3 + $0x28] sm:$0xff]
    %v169 = vld [vmem:[%s3 + $0x30] sm:$0xff]
    %v170 = vld [vmem:[%s3 + $0x38] sm:$0xff]
    %v171 = vld [vmem:[%s4] sm:$0x1]
    %v173 = vlaneseq
    %v174 = vshrl.u32 %v173, 7
    %v175 = vsub.s32 0, %v174
    %v176 = vrot.slane %v171, %v175
    %178 = vmatprep.subr.mxu0 0.0
    %179 = vmatpush1.msra.mxu0 %v35
    %180 = vmatprep.subr.mxu0 0.0
    %181 = vmatpush1.msra.mxu0 %v36
    %182 = vmatprep.subr.mxu0 0.0
    %183 = vmatpush1.msra.mxu0 %v37
    %184 = vmatprep.subr.mxu0 0.0
    %185 = vmatpush1.msra.mxu0 %v38
    %186 = vmatprep.subr.mxu0 0.0
    %187 = vmatpush1.msra.mxu0 %v39
    %188 = vmatprep.subr.mxu0 0.0
    %189 = vmatpush1.msra.mxu0 %v40
    %190 = vmatprep.subr.mxu0 0.0
    %191 = vmatpush1.msra.mxu0 %v41
    %192 = vmatprep.subr.mxu0 0.0
    %193 = vmatpush1.msra.mxu0 %v42
    %194 = vmatprep.subr.mxu0 0.0
    %195 = vmatpush1.msra.mxu0 %v43
    %196 = vmatprep.subr.mxu0 0.0
    %197 = vmatpush1.msra.mxu0 %v44
    %198 = vmatprep.subr.mxu0 0.0
    %199 = vmatpush1.msra.mxu0 %v45
    %200 = vmatprep.subr.mxu0 0.0
    %201 = vmatpush1.msra.mxu0 %v46
    %202 = vmatprep.subr.mxu0 0.0
    %203 = vmatpush1.msra.mxu0 %v47
    %204 = vmatprep.subr.mxu0 0.0
    %205 = vmatpush1.msra.mxu0 %v48
    %206 = vmatprep.subr.mxu0 0.0
    %207 = vmatpush1.msra.mxu0 %v49
    %208 = vmatprep.subr.mxu0 0.0
    %209 = vmatpush1.msra.mxu0 %v50
    %210 = vmatprep.subr.mxu0 0.0
    %211 = vmatpush1.msra.mxu0 %v51
    %212 = vmatprep.subr.mxu0 0.0
    %213 = vmatpush1.msra.mxu0 %v52
    %214 = vmatprep.subr.mxu0 0.0
    %215 = vmatpush1.msra.mxu0 %v53
    %216 = vmatprep.subr.mxu0 0.0
    %217 = vmatpush1.msra.mxu0 %v54
    %218 = vmatprep.subr.mxu0 0.0
    %219 = vmatpush1.msra.mxu0 %v55
    %220 = vmatprep.subr.mxu0 0.0
    %221 = vmatpush1.msra.mxu0 %v56
    %222 = vmatprep.subr.mxu0 0.0
    %223 = vmatpush1.msra.mxu0 %v57
    %224 = vmatprep.subr.mxu0 0.0
    %225 = vmatpush1.msra.mxu0 %v58
    %226 = vmatprep.subr.mxu0 0.0
    %227 = vmatpush1.msra.mxu0 %v59
    %228 = vmatprep.subr.mxu0 0.0
    %229 = vmatpush1.msra.mxu0 %v60
    %230 = vmatprep.subr.mxu0 0.0
    %231 = vmatpush1.msra.mxu0 %v61
    %232 = vmatprep.subr.mxu0 0.0
    %233 = vmatpush1.msra.mxu0 %v62
    %234 = vmatprep.subr.mxu0 0.0
    %235 = vmatpush1.msra.mxu0 %v63
    %236 = vmatprep.subr.mxu0 0.0
    %237 = vmatpush1.msra.mxu0 %v64
    %238 = vmatprep.subr.mxu0 0.0
    %239 = vmatpush1.msra.mxu0 %v65
    %240 = vmatprep.subr.mxu0 0.0
    %241 = vmatpush1.msra.mxu0 %v66
    %242 = vmatprep.mubr.f32.mxu0 %v28
    %243 = vmatmul.mubr.f32.gmra.mrb[0].mxu0 %v27
    %v244 = vpop.f32.mrb[0].mxu0
    %v245 = vadd.f32 %v176, %v244
    %v246 = vpop.f32.mrb[0].mxu0
    %247 = vdwg.mxu0
    %248 = vmatprep.subr.mxu0 0.0
    %249 = vmatpush1.msra.mxu0 %v67
    %250 = vmatprep.subr.mxu0 0.0
    %251 = vmatpush1.msra.mxu0 %v68
    %252 = vmatprep.subr.mxu0 0.0
    %253 = vmatpush1.msra.mxu0 %v69
    %254 = vmatprep.subr.mxu0 0.0
    %255 = vmatpush1.msra.mxu0 %v70
    %256 = vmatprep.subr.mxu0 0.0
    %257 = vmatpush1.msra.mxu0 %v71
    %258 = vmatprep.subr.mxu0 0.0
    %259 = vmatpush1.msra.mxu0 %v72
    %260 = vmatprep.subr.mxu0 0.0
    %261 = vmatpush1.msra.mxu0 %v73
    %262 = vmatprep.subr.mxu0 0.0
    %263 = vmatpush1.msra.mxu0 %v74
    %264 = vmatprep.subr.mxu0 0.0
    %265 = vmatpush1.msra.mxu0 %v75
    %266 = vmatprep.subr.mxu0 0.0
    %267 = vmatpush1.msra.mxu0 %v76
    %268 = vmatprep.subr.mxu0 0.0
    %269 = vmatpush1.msra.mxu0 %v77
    %270 = vmatprep.subr.mxu0 0.0
    %271 = vmatpush1.msra.mxu0 %v78
    %272 = vmatprep.subr.mxu0 0.0
    %273 = vmatpush1.msra.mxu0 %v79
    %274 = vmatprep.subr.mxu0 0.0
    %275 = vmatpush1.msra.mxu0 %v80
    %276 = vmatprep.subr.mxu0 0.0
    %277 = vmatpush1.msra.mxu0 %v81
    %278 = vmatprep.subr.mxu0 0.0
    %279 = vmatpush1.msra.mxu0 %v82
    %280 = vmatprep.subr.mxu0 0.0
    %281 = vmatpush1.msra.mxu0 %v83
    %282 = vmatprep.subr.mxu0 0.0
    %283 = vmatpush1.msra.mxu0 %v84
    %284 = vmatprep.subr.mxu0 0.0
    %285 = vmatpush1.msra.mxu0 %v85
    %286 = vmatprep.subr.mxu0 0.0
    %287 = vmatpush1.msra.mxu0 %v86
    %288 = vmatprep.subr.mxu0 0.0
    %289 = vmatpush1.msra.mxu0 %v87
    %290 = vmatprep.subr.mxu0 0.0
    %291 = vmatpush1.msra.mxu0 %v88
    %292 = vmatprep.subr.mxu0 0.0
    %293 = vmatpush1.msra.mxu0 %v89
    %294 = vmatprep.subr.mxu0 0.0
    %295 = vmatpush1.msra.mxu0 %v90
    %296 = vmatprep.subr.mxu0 0.0
    %297 = vmatpush1.msra.mxu0 %v91
    %298 = vmatprep.subr.mxu0 0.0
    %299 = vmatpush1.msra.mxu0 %v92
    %300 = vmatprep.subr.mxu0 0.0
    %301 = vmatpush1.msra.mxu0 %v93
    %302 = vmatprep.subr.mxu0 0.0
    %303 = vmatpush1.msra.mxu0 %v94
    %304 = vmatprep.subr.mxu0 0.0
    %305 = vmatpush1.msra.mxu0 %v95
    %306 = vmatprep.subr.mxu0 0.0
    %307 = vmatpush1.msra.mxu0 %v96
    %308 = vmatprep.subr.mxu0 0.0
    %309 = vmatpush1.msra.mxu0 %v97
    %310 = vmatprep.subr.mxu0 0.0
    %311 = vmatpush1.msra.mxu0 %v98
    %312 = vmatprep.mubr.f32.mxu0 %v30
    %313 = vmatmul.mubr.f32.gmra.mrb[0].mxu0 %v29
    %v314 = vpop.f32.mrb[0].mxu0
    %v315 = vadd.f32 %v245, %v314
    %v316 = vpop.f32.mrb[0].mxu0
    %317 = vdwg.mxu0
    %318 = vmatprep.subr.mxu0 0.0
    %319 = vmatpush1.msra.mxu0 %v99
    %320 = vmatprep.subr.mxu0 0.0
    %321 = vmatpush1.msra.mxu0 %v100
    %322 = vmatprep.subr.mxu0 0.0
    %323 = vmatpush1.msra.mxu0 %v101
    %324 = vmatprep.subr.mxu0 0.0
    %325 = vmatpush1.msra.mxu0 %v102
    %326 = vmatprep.subr.mxu0 0.0
    %327 = vmatpush1.msra.mxu0 %v103
    %328 = vmatprep.subr.mxu0 0.0
    %329 = vmatpush1.msra.mxu0 %v104
    %330 = vmatprep.subr.mxu0 0.0
    %331 = vmatpush1.msra.mxu0 %v105
    %332 = vmatprep.subr.mxu0 0.0
    %333 = vmatpush1.msra.mxu0 %v106
    %334 = vmatprep.subr.mxu0 0.0
    %335 = vmatpush1.msra.mxu0 %v107
    %336 = vmatprep.subr.mxu0 0.0
    %337 = vmatpush1.msra.mxu0 %v108
    %338 = vmatprep.subr.mxu0 0.0
    %339 = vmatpush1.msra.mxu0 %v109
    %340 = vmatprep.subr.mxu0 0.0
    %341 = vmatpush1.msra.mxu0 %v110
    %342 = vmatprep.subr.mxu0 0.0
    %343 = vmatpush1.msra.mxu0 %v111
    %344 = vmatprep.subr.mxu0 0.0
    %345 = vmatpush1.msra.mxu0 %v112
    %346 = vmatprep.subr.mxu0 0.0
    %347 = vmatpush1.msra.mxu0 %v113
    %348 = vmatprep.subr.mxu0 0.0
    %349 = vmatpush1.msra.mxu0 %v114
    %350 = vmatprep.subr.mxu0 0.0
    %351 = vmatpush1.msra.mxu0 %v115
    %352 = vmatprep.subr.mxu0 0.0
    %353 = vmatpush1.msra.mxu0 %v116
    %354 = vmatprep.subr.mxu0 0.0
    %355 = vmatpush1.msra.mxu0 %v117
    %356 = vmatprep.subr.mxu0 0.0
    %357 = vmatpush1.msra.mxu0 %v118
    %358 = vmatprep.subr.mxu0 0.0
    %359 = vmatpush1.msra.mxu0 %v119
    %360 = vmatprep.subr.mxu0 0.0
    %361 = vmatpush1.msra.mxu0 %v120
    %362 = vmatprep.subr.mxu0 0.0
    %363 = vmatpush1.msra.mxu0 %v121
    %364 = vmatprep.subr.mxu0 0.0
    %365 = vmatpush1.msra.mxu0 %v122
    %366 = vmatprep.subr.mxu0 0.0
    %367 = vmatpush1.msra.mxu0 %v123
    %368 = vmatprep.subr.mxu0 0.0
    %369 = vmatpush1.msra.mxu0 %v124
    %370 = vmatprep.subr.mxu0 0.0
    %371 = vmatpush1.msra.mxu0 %v125
    %372 = vmatprep.subr.mxu0 0.0
    %373 = vmatpush1.msra.mxu0 %v126
    %374 = vmatprep.subr.mxu0 0.0
    %375 = vmatpush1.msra.mxu0 %v127
    %376 = vmatprep.subr.mxu0 0.0
    %377 = vmatpush1.msra.mxu0 %v128
    %378 = vmatprep.subr.mxu0 0.0
    %379 = vmatpush1.msra.mxu0 %v129
    %380 = vmatprep.subr.mxu0 0.0
    %381 = vmatpush1.msra.mxu0 %v130
    %382 = vmatprep.mubr.f32.mxu0 %v32
    %383 = vmatmul.mubr.f32.gmra.mrb[0].mxu0 %v31
    %v384 = vpop.f32.mrb[0].mxu0
    %v385 = vadd.f32 %v315, %v384
    %v386 = vpop.f32.mrb[0].mxu0
    %387 = vdwg.mxu0
    %388 = vmatprep.subr.mxu0 0.0
    %389 = vmatpush1.msra.mxu0 %v131
    %390 = vmatprep.subr.mxu0 0.0
    %391 = vmatpush1.msra.mxu0 %v132
    %392 = vmatprep.subr.mxu0 0.0
    %393 = vmatpush1.msra.mxu0 %v133
    %394 = vmatprep.subr.mxu0 0.0
    %395 = vmatpush1.msra.mxu0 %v134
    %396 = vmatprep.subr.mxu0 0.0
    %397 = vmatpush1.msra.mxu0 %v135
    %398 = vmatprep.subr.mxu0 0.0
    %399 = vmatpush1.msra.mxu0 %v136
    %400 = vmatprep.subr.mxu0 0.0
    %401 = vmatpush1.msra.mxu0 %v137
    %402 = vmatprep.subr.mxu0 0.0
    %403 = vmatpush1.msra.mxu0 %v138
    %404 = vmatprep.subr.mxu0 0.0
    %405 = vmatpush1.msra.mxu0 %v139
    %406 = vmatprep.subr.mxu0 0.0
    %407 = vmatpush1.msra.mxu0 %v140
    %408 = vmatprep.subr.mxu0 0.0
    %409 = vmatpush1.msra.mxu0 %v141
    %410 = vmatprep.subr.mxu0 0.0
    %411 = vmatpush1.msra.mxu0 %v142
    %412 = vmatprep.subr.mxu0 0.0
    %413 = vmatpush1.msra.mxu0 %v143
    %414 = vmatprep.subr.mxu0 0.0
    %415 = vmatpush1.msra.mxu0 %v144
    %416 = vmatprep.subr.mxu0 0.0
    %417 = vmatpush1.msra.mxu0 %v145
    %418 = vmatprep.subr.mxu0 0.0
    %419 = vmatpush1.msra.mxu0 %v146
    %420 = vmatprep.subr.mxu0 0.0
    %421 = vmatpush1.msra.mxu0 %v147
    %422 = vmatprep.subr.mxu0 0.0
    %423 = vmatpush1.msra.mxu0 %v148
    %424 = vmatprep.subr.mxu0 0.0
    %425 = vmatpush1.msra.mxu0 %v149
    %426 = vmatprep.subr.mxu0 0.0
    %427 = vmatpush1.msra.mxu0 %v150
    %428 = vmatprep.subr.mxu0 0.0
    %429 = vmatpush1.msra.mxu0 %v151
    %430 = vmatprep.subr.mxu0 0.0
    %431 = vmatpush1.msra.mxu0 %v152
    %432 = vmatprep.subr.mxu0 0.0
    %433 = vmatpush1.msra.mxu0 %v153
    %434 = vmatprep.subr.mxu0 0.0
    %435 = vmatpush1.msra.mxu0 %v154
    %436 = vmatprep.subr.mxu0 0.0
    %437 = vmatpush1.msra.mxu0 %v155
    %438 = vmatprep.subr.mxu0 0.0
    %439 = vmatpush1.msra.mxu0 %v156
    %440 = vmatprep.subr.mxu0 0.0
    %441 = vmatpush1.msra.mxu0 %v157
    %442 = vmatprep.subr.mxu0 0.0
    %443 = vmatpush1.msra.mxu0 %v158
    %444 = vmatprep.subr.mxu0 0.0
    %445 = vmatpush1.msra.mxu0 %v159
    %446 = vmatprep.subr.mxu0 0.0
    %447 = vmatpush1.msra.mxu0 %v160
    %448 = vmatprep.subr.mxu0 0.0
    %449 = vmatpush1.msra.mxu0 %v161
    %450 = vmatprep.subr.mxu0 0.0
    %451 = vmatpush1.msra.mxu0 %v162
    %452 = vmatprep.mubr.f32.mxu0 %v34
    %453 = vmatmul.mubr.f32.gmra.mrb[0].mxu0 %v33
    %v454 = vpop.f32.mrb[0].mxu0
    %v455 = vadd.f32 %v385, %v454
    %v456 = vpop.f32.mrb[0].mxu0
    %457 = vdwg.mxu0
    %vm458 = vcmask 64512
    %v459 = vsel %vm458, %v455, -inf
    %460 = vmax.xlane.f32.xlu0 %v459
    %v461 = vpop.xlane.xlu0 %460
    %v462 = vsub.f32 %v455, %v461
    %v463 = vmul.f32 %v462, 1.442695
    %v464 = vpow.pop %v463
    %v465 = vsel %vm458, %v464, 0.0
    %466 = vadd.xlane.f32.xlu0 %v465
    %v467 = vpop.xlane.xlu0 %466
    %v468 = vrcp.pop %v467
    %v469 = vmul.f32 %v464, %v468
    %v470 = vlog2.pop %v467
    %v471 = vmul.f32 %v470, 0.6931472
    %v472 = vsub.f32 %v462, %v471
    %v473 = vld [vmem:[%s1] sm:$0xff]
    %v474 = vld [vmem:[%s1 + $0x8] sm:$0xff]
    %v475 = vld [vmem:[%s1 + $0x10] sm:$0xff]
    %v476 = vld [vmem:[%s1 + $0x18] sm:$0xff]
    %v477 = vld [vmem:[%s1 + $0x20] sm:$0xff]
    %v478 = vld [vmem:[%s1 + $0x28] sm:$0xff]
    %v479 = vld [vmem:[%s1 + $0x30] sm:$0xff]
    %v480 = vld [vmem:[%s1 + $0x38] sm:$0xff]
    %v481 = vmul.f32 %v473, %v473
    %v482 = vmul.f32 %v474, %v474
    %v483 = vmul.f32 %v475, %v475
    %v484 = vmul.f32 %v476, %v476
    %v485 = vmul.f32 %v477, %v477
    %v486 = vmul.f32 %v478, %v478
    %v487 = vmul.f32 %v479, %v479
    %v488 = vmul.f32 %v480, %v480
    %v489 = vadd.f32 %v481, %v482
    %v490 = vadd.f32 %v489, %v483
    %v491 = vadd.f32 %v490, %v484
    %v492 = vadd.f32 %v491, %v485
    %v493 = vadd.f32 %v492, %v486
    %v494 = vadd.f32 %v493, %v487
    %v495 = vadd.f32 %v494, %v488
    %496 = vadd.xlane.f32.xlu0 %v495
    %v497 = vpop.xlane.xlu0 %496
    %v498 = vadd.f32 %v497, 1e-16
    %v499 = vrsqrt.pop %v498
    %v500 = vmul.f32 %v473, %v499
    %v501 = vmul.f32 %v474, %v499
    %v502 = vmul.f32 %v475, %v499
    %v503 = vmul.f32 %v476, %v499
    %v504 = vmul.f32 %v477, %v499
    %v505 = vmul.f32 %v478, %v499
    %v506 = vmul.f32 %v479, %v499
    %v507 = vmul.f32 %v480, %v499
    %508 = vmatprep.subr.mxu0 0.0
    %509 = vmatpush1.msra.mxu0 %v35
    %510 = vmatprep.subr.mxu0 0.0
    %511 = vmatpush1.msra.mxu0 %v36
    %512 = vmatprep.subr.mxu0 0.0
    %513 = vmatpush1.msra.mxu0 %v37
    %514 = vmatprep.subr.mxu0 0.0
    %515 = vmatpush1.msra.mxu0 %v38
    %516 = vmatprep.subr.mxu0 0.0
    %517 = vmatpush1.msra.mxu0 %v39
    %518 = vmatprep.subr.mxu0 0.0
    %519 = vmatpush1.msra.mxu0 %v40
    %520 = vmatprep.subr.mxu0 0.0
    %521 = vmatpush1.msra.mxu0 %v41
    %522 = vmatprep.subr.mxu0 0.0
    %523 = vmatpush1.msra.mxu0 %v42
    %524 = vmatprep.subr.mxu0 0.0
    %525 = vmatpush1.msra.mxu0 %v43
    %526 = vmatprep.subr.mxu0 0.0
    %527 = vmatpush1.msra.mxu0 %v44
    %528 = vmatprep.subr.mxu0 0.0
    %529 = vmatpush1.msra.mxu0 %v45
    %530 = vmatprep.subr.mxu0 0.0
    %531 = vmatpush1.msra.mxu0 %v46
    %532 = vmatprep.subr.mxu0 0.0
    %533 = vmatpush1.msra.mxu0 %v47
    %534 = vmatprep.subr.mxu0 0.0
    %535 = vmatpush1.msra.mxu0 %v48
    %536 = vmatprep.subr.mxu0 0.0
    %537 = vmatpush1.msra.mxu0 %v49
    %538 = vmatprep.subr.mxu0 0.0
    %539 = vmatpush1.msra.mxu0 %v50
    %540 = vmatprep.subr.mxu0 0.0
    %541 = vmatpush1.msra.mxu0 %v51
    %542 = vmatprep.subr.mxu0 0.0
    %543 = vmatpush1.msra.mxu0 %v52
    %544 = vmatprep.subr.mxu0 0.0
    %545 = vmatpush1.msra.mxu0 %v53
    %546 = vmatprep.subr.mxu0 0.0
    %547 = vmatpush1.msra.mxu0 %v54
    %548 = vmatprep.subr.mxu0 0.0
    %549 = vmatpush1.msra.mxu0 %v55
    %550 = vmatprep.subr.mxu0 0.0
    %551 = vmatpush1.msra.mxu0 %v56
    %552 = vmatprep.subr.mxu0 0.0
    %553 = vmatpush1.msra.mxu0 %v57
    %554 = vmatprep.subr.mxu0 0.0
    %555 = vmatpush1.msra.mxu0 %v58
    %556 = vmatprep.subr.mxu0 0.0
    %557 = vmatpush1.msra.mxu0 %v59
    %558 = vmatprep.subr.mxu0 0.0
    %559 = vmatpush1.msra.mxu0 %v60
    %560 = vmatprep.subr.mxu0 0.0
    %561 = vmatpush1.msra.mxu0 %v61
    %562 = vmatprep.subr.mxu0 0.0
    %563 = vmatpush1.msra.mxu0 %v62
    %564 = vmatprep.subr.mxu0 0.0
    %565 = vmatpush1.msra.mxu0 %v63
    %566 = vmatprep.subr.mxu0 0.0
    %567 = vmatpush1.msra.mxu0 %v64
    %568 = vmatprep.subr.mxu0 0.0
    %569 = vmatpush1.msra.mxu0 %v65
    %570 = vmatprep.subr.mxu0 0.0
    %571 = vmatpush1.msra.mxu0 %v66
    %572 = vmatprep.mubr.f32.mxu0 %v501
    %573 = vmatmul.mubr.f32.gmra.mrb[0].mxu0 %v500
    %v574 = vpop.f32.mrb[0].mxu0
    %v575 = vadd.f32 0.0, %v574
    %v576 = vpop.f32.mrb[0].mxu0
    %577 = vdwg.mxu0
    %578 = vmatprep.subr.mxu0 0.0
    %579 = vmatpush1.msra.mxu0 %v67
    %580 = vmatprep.subr.mxu0 0.0
    %581 = vmatpush1.msra.mxu0 %v68
    %582 = vmatprep.subr.mxu0 0.0
    %583 = vmatpush1.msra.mxu0 %v69
    %584 = vmatprep.subr.mxu0 0.0
    %585 = vmatpush1.msra.mxu0 %v70
    %586 = vmatprep.subr.mxu0 0.0
    %587 = vmatpush1.msra.mxu0 %v71
    %588 = vmatprep.subr.mxu0 0.0
    %589 = vmatpush1.msra.mxu0 %v72
    %590 = vmatprep.subr.mxu0 0.0
    %591 = vmatpush1.msra.mxu0 %v73
    %592 = vmatprep.subr.mxu0 0.0
    %593 = vmatpush1.msra.mxu0 %v74
    %594 = vmatprep.subr.mxu0 0.0
    %595 = vmatpush1.msra.mxu0 %v75
    %596 = vmatprep.subr.mxu0 0.0
    %597 = vmatpush1.msra.mxu0 %v76
    %598 = vmatprep.subr.mxu0 0.0
    %599 = vmatpush1.msra.mxu0 %v77
    %600 = vmatprep.subr.mxu0 0.0
    %601 = vmatpush1.msra.mxu0 %v78
    %602 = vmatprep.subr.mxu0 0.0
    %603 = vmatpush1.msra.mxu0 %v79
    %604 = vmatprep.subr.mxu0 0.0
    %605 = vmatpush1.msra.mxu0 %v80
    %606 = vmatprep.subr.mxu0 0.0
    %607 = vmatpush1.msra.mxu0 %v81
    %608 = vmatprep.subr.mxu0 0.0
    %609 = vmatpush1.msra.mxu0 %v82
    %610 = vmatprep.subr.mxu0 0.0
    %611 = vmatpush1.msra.mxu0 %v83
    %612 = vmatprep.subr.mxu0 0.0
    %613 = vmatpush1.msra.mxu0 %v84
    %614 = vmatprep.subr.mxu0 0.0
    %615 = vmatpush1.msra.mxu0 %v85
    %616 = vmatprep.subr.mxu0 0.0
    %617 = vmatpush1.msra.mxu0 %v86
    %618 = vmatprep.subr.mxu0 0.0
    %619 = vmatpush1.msra.mxu0 %v87
    %620 = vmatprep.subr.mxu0 0.0
    %621 = vmatpush1.msra.mxu0 %v88
    %622 = vmatprep.subr.mxu0 0.0
    %623 = vmatpush1.msra.mxu0 %v89
    %624 = vmatprep.subr.mxu0 0.0
    %625 = vmatpush1.msra.mxu0 %v90
    %626 = vmatprep.subr.mxu0 0.0
    %627 = vmatpush1.msra.mxu0 %v91
    %628 = vmatprep.subr.mxu0 0.0
    %629 = vmatpush1.msra.mxu0 %v92
    %630 = vmatprep.subr.mxu0 0.0
    %631 = vmatpush1.msra.mxu0 %v93
    %632 = vmatprep.subr.mxu0 0.0
    %633 = vmatpush1.msra.mxu0 %v94
    %634 = vmatprep.subr.mxu0 0.0
    %635 = vmatpush1.msra.mxu0 %v95
    %636 = vmatprep.subr.mxu0 0.0
    %637 = vmatpush1.msra.mxu0 %v96
    %638 = vmatprep.subr.mxu0 0.0
    %639 = vmatpush1.msra.mxu0 %v97
    %640 = vmatprep.subr.mxu0 0.0
    %641 = vmatpush1.msra.mxu0 %v98
    %642 = vmatprep.mubr.f32.mxu0 %v503
    %643 = vmatmul.mubr.f32.gmra.mrb[0].mxu0 %v502
    %v644 = vpop.f32.mrb[0].mxu0
    %v645 = vadd.f32 %v575, %v644
    %v646 = vpop.f32.mrb[0].mxu0
    %647 = vdwg.mxu0
    %648 = vmatprep.subr.mxu0 0.0
    %649 = vmatpush1.msra.mxu0 %v99
    %650 = vmatprep.subr.mxu0 0.0
    %651 = vmatpush1.msra.mxu0 %v100
    %652 = vmatprep.subr.mxu0 0.0
    %653 = vmatpush1.msra.mxu0 %v101
    %654 = vmatprep.subr.mxu0 0.0
    %655 = vmatpush1.msra.mxu0 %v102
    %656 = vmatprep.subr.mxu0 0.0
    %657 = vmatpush1.msra.mxu0 %v103
    %658 = vmatprep.subr.mxu0 0.0
    %659 = vmatpush1.msra.mxu0 %v104
    %660 = vmatprep.subr.mxu0 0.0
    %661 = vmatpush1.msra.mxu0 %v105
    %662 = vmatprep.subr.mxu0 0.0
    %663 = vmatpush1.msra.mxu0 %v106
    %664 = vmatprep.subr.mxu0 0.0
    %665 = vmatpush1.msra.mxu0 %v107
    %666 = vmatprep.subr.mxu0 0.0
    %667 = vmatpush1.msra.mxu0 %v108
    %668 = vmatprep.subr.mxu0 0.0
    %669 = vmatpush1.msra.mxu0 %v109
    %670 = vmatprep.subr.mxu0 0.0
    %671 = vmatpush1.msra.mxu0 %v110
    %672 = vmatprep.subr.mxu0 0.0
    %673 = vmatpush1.msra.mxu0 %v111
    %674 = vmatprep.subr.mxu0 0.0
    %675 = vmatpush1.msra.mxu0 %v112
    %676 = vmatprep.subr.mxu0 0.0
    %677 = vmatpush1.msra.mxu0 %v113
    %678 = vmatprep.subr.mxu0 0.0
    %679 = vmatpush1.msra.mxu0 %v114
    %680 = vmatprep.subr.mxu0 0.0
    %681 = vmatpush1.msra.mxu0 %v115
    %682 = vmatprep.subr.mxu0 0.0
    %683 = vmatpush1.msra.mxu0 %v116
    %684 = vmatprep.subr.mxu0 0.0
    %685 = vmatpush1.msra.mxu0 %v117
    %686 = vmatprep.subr.mxu0 0.0
    %687 = vmatpush1.msra.mxu0 %v118
    %688 = vmatprep.subr.mxu0 0.0
    %689 = vmatpush1.msra.mxu0 %v119
    %690 = vmatprep.subr.mxu0 0.0
    %691 = vmatpush1.msra.mxu0 %v120
    %692 = vmatprep.subr.mxu0 0.0
    %693 = vmatpush1.msra.mxu0 %v121
    %694 = vmatprep.subr.mxu0 0.0
    %695 = vmatpush1.msra.mxu0 %v122
    %696 = vmatprep.subr.mxu0 0.0
    %697 = vmatpush1.msra.mxu0 %v123
    %698 = vmatprep.subr.mxu0 0.0
    %699 = vmatpush1.msra.mxu0 %v124
    %700 = vmatprep.subr.mxu0 0.0
    %701 = vmatpush1.msra.mxu0 %v125
    %702 = vmatprep.subr.mxu0 0.0
    %703 = vmatpush1.msra.mxu0 %v126
    %704 = vmatprep.subr.mxu0 0.0
    %705 = vmatpush1.msra.mxu0 %v127
    %706 = vmatprep.subr.mxu0 0.0
    %707 = vmatpush1.msra.mxu0 %v128
    %708 = vmatprep.subr.mxu0 0.0
    %709 = vmatpush1.msra.mxu0 %v129
    %710 = vmatprep.subr.mxu0 0.0
    %711 = vmatpush1.msra.mxu0 %v130
    %712 = vmatprep.mubr.f32.mxu0 %v505
    %713 = vmatmul.mubr.f32.gmra.mrb[0].mxu0 %v504
    %v714 = vpop.f32.mrb[0].mxu0
    %v715 = vadd.f32 %v645, %v714
    %v716 = vpop.f32.mrb[0].mxu0
    %717 = vdwg.mxu0
    %718 = vmatprep.subr.mxu0 0.0
    %719 = vmatpush1.msra.mxu0 %v131
    %720 = vmatprep.subr.mxu0 0.0
    %721 = vmatpush1.msra.mxu0 %v132
    %722 = vmatprep.subr.mxu0 0.0
    %723 = vmatpush1.msra.mxu0 %v133
    %724 = vmatprep.subr.mxu0 0.0
    %725 = vmatpush1.msra.mxu0 %v134
    %726 = vmatprep.subr.mxu0 0.0
    %727 = vmatpush1.msra.mxu0 %v135
    %728 = vmatprep.subr.mxu0 0.0
    %729 = vmatpush1.msra.mxu0 %v136
    %730 = vmatprep.subr.mxu0 0.0
    %731 = vmatpush1.msra.mxu0 %v137
    %732 = vmatprep.subr.mxu0 0.0
    %733 = vmatpush1.msra.mxu0 %v138
    %734 = vmatprep.subr.mxu0 0.0
    %735 = vmatpush1.msra.mxu0 %v139
    %736 = vmatprep.subr.mxu0 0.0
    %737 = vmatpush1.msra.mxu0 %v140
    %738 = vmatprep.subr.mxu0 0.0
    %739 = vmatpush1.msra.mxu0 %v141
    %740 = vmatprep.subr.mxu0 0.0
    %741 = vmatpush1.msra.mxu0 %v142
    %742 = vmatprep.subr.mxu0 0.0
    %743 = vmatpush1.msra.mxu0 %v143
    %744 = vmatprep.subr.mxu0 0.0
    %745 = vmatpush1.msra.mxu0 %v144
    %746 = vmatprep.subr.mxu0 0.0
    %747 = vmatpush1.msra.mxu0 %v145
    %748 = vmatprep.subr.mxu0 0.0
    %749 = vmatpush1.msra.mxu0 %v146
    %750 = vmatprep.subr.mxu0 0.0
    %751 = vmatpush1.msra.mxu0 %v147
    %752 = vmatprep.subr.mxu0 0.0
    %753 = vmatpush1.msra.mxu0 %v148
    %754 = vmatprep.subr.mxu0 0.0
    %755 = vmatpush1.msra.mxu0 %v149
    %756 = vmatprep.subr.mxu0 0.0
    %757 = vmatpush1.msra.mxu0 %v150
    %758 = vmatprep.subr.mxu0 0.0
    %759 = vmatpush1.msra.mxu0 %v151
    %760 = vmatprep.subr.mxu0 0.0
    %761 = vmatpush1.msra.mxu0 %v152
    %762 = vmatprep.subr.mxu0 0.0
    %763 = vmatpush1.msra.mxu0 %v153
    %764 = vmatprep.subr.mxu0 0.0
    %765 = vmatpush1.msra.mxu0 %v154
    %766 = vmatprep.subr.mxu0 0.0
    %767 = vmatpush1.msra.mxu0 %v155
    %768 = vmatprep.subr.mxu0 0.0
    %769 = vmatpush1.msra.mxu0 %v156
    %770 = vmatprep.subr.mxu0 0.0
    %771 = vmatpush1.msra.mxu0 %v157
    %772 = vmatprep.subr.mxu0 0.0
    %773 = vmatpush1.msra.mxu0 %v158
    %774 = vmatprep.subr.mxu0 0.0
    %775 = vmatpush1.msra.mxu0 %v159
    %776 = vmatprep.subr.mxu0 0.0
    %777 = vmatpush1.msra.mxu0 %v160
    %778 = vmatprep.subr.mxu0 0.0
    %779 = vmatpush1.msra.mxu0 %v161
    %780 = vmatprep.subr.mxu0 0.0
    %781 = vmatpush1.msra.mxu0 %v162
    %782 = vmatprep.mubr.f32.mxu0 %v507
    %783 = vmatmul.mubr.f32.gmra.mrb[0].mxu0 %v506
    %v784 = vpop.f32.mrb[0].mxu0
    %v785 = vadd.f32 %v715, %v784
    %v786 = vpop.f32.mrb[0].mxu0
    %787 = vdwg.mxu0
    %v788 = vmul.f32 %v785, 10.0
    %v789 = vadd.f32 %v455, %v788
    %v790 = vsel %vm458, %v789, -inf
    %791 = vmax.xlane.f32.xlu0 %v790
    %v792 = vpop.xlane.xlu0 %791
    %v793 = vsub.f32 %v789, %v792
    %v794 = vmul.f32 %v793, 1.442695
    %v795 = vpow.pop %v794
    %v796 = vsel %vm458, %v795, 0.0
    %797 = vadd.xlane.f32.xlu0 %v796
    %v798 = vpop.xlane.xlu0 %797
    %v799 = vrcp.pop %v798
    %v800 = vmul.f32 %v795, %v799
    %v801 = vsub.f32 %v800, %v469
    %v803 = vsel %vm458, %v801, 0
    %805 = vmatprep.subr.mxu0 %v164
    %806 = vmatpush1.msra.mxu0 %v163
    %807 = vmatprep.subr.mxu0 0.0
    %808 = vmatpush1.msra.mxu0 0.0
    %809 = vmatprep.subr.mxu0 0.0
    %810 = vmatpush1.msra.mxu0 0.0
    %811 = vmatprep.subr.mxu0 0.0
    %812 = vmatpush1.msra.mxu0 0.0
    %813 = vmatprep.subr.mxu0 0.0
    %814 = vmatpush1.msra.mxu0 0.0
    %815 = vmatprep.subr.mxu0 0.0
    %816 = vmatpush1.msra.mxu0 0.0
    %817 = vmatprep.subr.mxu0 0.0
    %818 = vmatpush1.msra.mxu0 0.0
    %819 = vmatprep.subr.mxu0 0.0
    %820 = vmatpush1.msra.mxu0 0.0
    %821 = vmatprep.subr.mxu0 0.0
    %822 = vmatpush1.msra.mxu0 0.0
    %823 = vmatprep.subr.mxu0 0.0
    %824 = vmatpush1.msra.mxu0 0.0
    %825 = vmatprep.subr.mxu0 0.0
    %826 = vmatpush1.msra.mxu0 0.0
    %827 = vmatprep.subr.mxu0 0.0
    %828 = vmatpush1.msra.mxu0 0.0
    %829 = vmatprep.subr.mxu0 0.0
    %830 = vmatpush1.msra.mxu0 0.0
    %831 = vmatprep.subr.mxu0 0.0
    %832 = vmatpush1.msra.mxu0 0.0
    %833 = vmatprep.subr.mxu0 0.0
    %834 = vmatpush1.msra.mxu0 0.0
    %835 = vmatprep.subr.mxu0 0.0
    %836 = vmatpush1.msra.mxu0 0.0
    %837 = vmatprep.subr.mxu0 0.0
    %838 = vmatpush1.msra.mxu0 0.0
    %839 = vmatprep.subr.mxu0 0.0
    %840 = vmatpush1.msra.mxu0 0.0
    %841 = vmatprep.subr.mxu0 0.0
    %842 = vmatpush1.msra.mxu0 0.0
    %843 = vmatprep.subr.mxu0 0.0
    %844 = vmatpush1.msra.mxu0 0.0
    %845 = vmatprep.subr.mxu0 0.0
    %846 = vmatpush1.msra.mxu0 0.0
    %847 = vmatprep.subr.mxu0 0.0
    %848 = vmatpush1.msra.mxu0 0.0
    %849 = vmatprep.subr.mxu0 0.0
    %850 = vmatpush1.msra.mxu0 0.0
    %851 = vmatprep.subr.mxu0 0.0
    %852 = vmatpush1.msra.mxu0 0.0
    %853 = vmatprep.subr.mxu0 0.0
    %854 = vmatpush1.msra.mxu0 0.0
    %855 = vmatprep.subr.mxu0 0.0
    %856 = vmatpush1.msra.mxu0 0.0
    %857 = vmatprep.subr.mxu0 0.0
    %858 = vmatpush1.msra.mxu0 0.0
    %859 = vmatprep.subr.mxu0 0.0
    %860 = vmatpush1.msra.mxu0 0.0
    %861 = vmatprep.subr.mxu0 0.0
    %862 = vmatpush1.msra.mxu0 0.0
    %863 = vmatprep.subr.mxu0 0.0
    %864 = vmatpush1.msra.mxu0 0.0
    %865 = vmatprep.subr.mxu0 0.0
    %866 = vmatpush1.msra.mxu0 0.0
    %867 = vmatprep.subr.mxu0 0.0
    %868 = vmatpush1.msra.mxu0 0.0
    %869 = vmatprep.mubr.f32.mxu0 0.0
    %870 = vmatmul.mubr.f32.gmra.mrb[0].mxu0 %v803
    %v871 = vpop.f32.mrb[0].mxu0
    %v872 = vadd.f32 0.0, %v871
    %v873 = vpop.f32.mrb[0].mxu0
    %v874 = vadd.f32 0.0, %v873
    %875 = vdwg.mxu0
    %876 = vmatprep.subr.mxu0 %v166
    %877 = vmatpush1.msra.mxu0 %v165
    %878 = vmatprep.subr.mxu0 0.0
    %879 = vmatpush1.msra.mxu0 0.0
    %880 = vmatprep.subr.mxu0 0.0
    %881 = vmatpush1.msra.mxu0 0.0
    %882 = vmatprep.subr.mxu0 0.0
    %883 = vmatpush1.msra.mxu0 0.0
    %884 = vmatprep.subr.mxu0 0.0
    %885 = vmatpush1.msra.mxu0 0.0
    %886 = vmatprep.subr.mxu0 0.0
    %887 = vmatpush1.msra.mxu0 0.0
    %888 = vmatprep.subr.mxu0 0.0
    %889 = vmatpush1.msra.mxu0 0.0
    %890 = vmatprep.subr.mxu0 0.0
    %891 = vmatpush1.msra.mxu0 0.0
    %892 = vmatprep.subr.mxu0 0.0
    %893 = vmatpush1.msra.mxu0 0.0
    %894 = vmatprep.subr.mxu0 0.0
    %895 = vmatpush1.msra.mxu0 0.0
    %896 = vmatprep.subr.mxu0 0.0
    %897 = vmatpush1.msra.mxu0 0.0
    %898 = vmatprep.subr.mxu0 0.0
    %899 = vmatpush1.msra.mxu0 0.0
    %900 = vmatprep.subr.mxu0 0.0
    %901 = vmatpush1.msra.mxu0 0.0
    %902 = vmatprep.subr.mxu0 0.0
    %903 = vmatpush1.msra.mxu0 0.0
    %904 = vmatprep.subr.mxu0 0.0
    %905 = vmatpush1.msra.mxu0 0.0
    %906 = vmatprep.subr.mxu0 0.0
    %907 = vmatpush1.msra.mxu0 0.0
    %908 = vmatprep.subr.mxu0 0.0
    %909 = vmatpush1.msra.mxu0 0.0
    %910 = vmatprep.subr.mxu0 0.0
    %911 = vmatpush1.msra.mxu0 0.0
    %912 = vmatprep.subr.mxu0 0.0
    %913 = vmatpush1.msra.mxu0 0.0
    %914 = vmatprep.subr.mxu0 0.0
    %915 = vmatpush1.msra.mxu0 0.0
    %916 = vmatprep.subr.mxu0 0.0
    %917 = vmatpush1.msra.mxu0 0.0
    %918 = vmatprep.subr.mxu0 0.0
    %919 = vmatpush1.msra.mxu0 0.0
    %920 = vmatprep.subr.mxu0 0.0
    %921 = vmatpush1.msra.mxu0 0.0
    %922 = vmatprep.subr.mxu0 0.0
    %923 = vmatpush1.msra.mxu0 0.0
    %924 = vmatprep.subr.mxu0 0.0
    %925 = vmatpush1.msra.mxu0 0.0
    %926 = vmatprep.subr.mxu0 0.0
    %927 = vmatpush1.msra.mxu0 0.0
    %928 = vmatprep.subr.mxu0 0.0
    %929 = vmatpush1.msra.mxu0 0.0
    %930 = vmatprep.subr.mxu0 0.0
    %931 = vmatpush1.msra.mxu0 0.0
    %932 = vmatprep.subr.mxu0 0.0
    %933 = vmatpush1.msra.mxu0 0.0
    %934 = vmatprep.subr.mxu0 0.0
    %935 = vmatpush1.msra.mxu0 0.0
    %936 = vmatprep.subr.mxu0 0.0
    %937 = vmatpush1.msra.mxu0 0.0
    %938 = vmatprep.subr.mxu0 0.0
    %939 = vmatpush1.msra.mxu0 0.0
    %940 = vmatprep.mubr.f32.mxu0 0.0
    %941 = vmatmul.mubr.f32.gmra.mrb[0].mxu0 %v803
    %v942 = vpop.f32.mrb[0].mxu0
    %v943 = vadd.f32 0.0, %v942
    %v944 = vpop.f32.mrb[0].mxu0
    %v945 = vadd.f32 0.0, %v944
    %946 = vdwg.mxu0
    %947 = vmatprep.subr.mxu0 %v168
    %948 = vmatpush1.msra.mxu0 %v167
    %949 = vmatprep.subr.mxu0 0.0
    %950 = vmatpush1.msra.mxu0 0.0
    %951 = vmatprep.subr.mxu0 0.0
    %952 = vmatpush1.msra.mxu0 0.0
    %953 = vmatprep.subr.mxu0 0.0
    %954 = vmatpush1.msra.mxu0 0.0
    %955 = vmatprep.subr.mxu0 0.0
    %956 = vmatpush1.msra.mxu0 0.0
    %957 = vmatprep.subr.mxu0 0.0
    %958 = vmatpush1.msra.mxu0 0.0
    %959 = vmatprep.subr.mxu0 0.0
    %960 = vmatpush1.msra.mxu0 0.0
    %961 = vmatprep.subr.mxu0 0.0
    %962 = vmatpush1.msra.mxu0 0.0
    %963 = vmatprep.subr.mxu0 0.0
    %964 = vmatpush1.msra.mxu0 0.0
    %965 = vmatprep.subr.mxu0 0.0
    %966 = vmatpush1.msra.mxu0 0.0
    %967 = vmatprep.subr.mxu0 0.0
    %968 = vmatpush1.msra.mxu0 0.0
    %969 = vmatprep.subr.mxu0 0.0
    %970 = vmatpush1.msra.mxu0 0.0
    %971 = vmatprep.subr.mxu0 0.0
    %972 = vmatpush1.msra.mxu0 0.0
    %973 = vmatprep.subr.mxu0 0.0
    %974 = vmatpush1.msra.mxu0 0.0
    %975 = vmatprep.subr.mxu0 0.0
    %976 = vmatpush1.msra.mxu0 0.0
    %977 = vmatprep.subr.mxu0 0.0
    %978 = vmatpush1.msra.mxu0 0.0
    %979 = vmatprep.subr.mxu0 0.0
    %980 = vmatpush1.msra.mxu0 0.0
    %981 = vmatprep.subr.mxu0 0.0
    %982 = vmatpush1.msra.mxu0 0.0
    %983 = vmatprep.subr.mxu0 0.0
    %984 = vmatpush1.msra.mxu0 0.0
    %985 = vmatprep.subr.mxu0 0.0
    %986 = vmatpush1.msra.mxu0 0.0
    %987 = vmatprep.subr.mxu0 0.0
    %988 = vmatpush1.msra.mxu0 0.0
    %989 = vmatprep.subr.mxu0 0.0
    %990 = vmatpush1.msra.mxu0 0.0
    %991 = vmatprep.subr.mxu0 0.0
    %992 = vmatpush1.msra.mxu0 0.0
    %993 = vmatprep.subr.mxu0 0.0
    %994 = vmatpush1.msra.mxu0 0.0
    %995 = vmatprep.subr.mxu0 0.0
    %996 = vmatpush1.msra.mxu0 0.0
    %997 = vmatprep.subr.mxu0 0.0
    %998 = vmatpush1.msra.mxu0 0.0
    %999 = vmatprep.subr.mxu0 0.0
    %1000 = vmatpush1.msra.mxu0 0.0
    %1001 = vmatprep.subr.mxu0 0.0
    %1002 = vmatpush1.msra.mxu0 0.0
    %1003 = vmatprep.subr.mxu0 0.0
    %1004 = vmatpush1.msra.mxu0 0.0
    %1005 = vmatprep.subr.mxu0 0.0
    %1006 = vmatpush1.msra.mxu0 0.0
    %1007 = vmatprep.subr.mxu0 0.0
    %1008 = vmatpush1.msra.mxu0 0.0
    %1009 = vmatprep.subr.mxu0 0.0
    %1010 = vmatpush1.msra.mxu0 0.0
    %1011 = vmatprep.mubr.f32.mxu0 0.0
    %1012 = vmatmul.mubr.f32.gmra.mrb[0].mxu0 %v803
    %v1013 = vpop.f32.mrb[0].mxu0
    %v1014 = vadd.f32 0.0, %v1013
    %v1015 = vpop.f32.mrb[0].mxu0
    %v1016 = vadd.f32 0.0, %v1015
    %1017 = vdwg.mxu0
    %1018 = vmatprep.subr.mxu0 %v170
    %1019 = vmatpush1.msra.mxu0 %v169
    %1020 = vmatprep.subr.mxu0 0.0
    %1021 = vmatpush1.msra.mxu0 0.0
    %1022 = vmatprep.subr.mxu0 0.0
    %1023 = vmatpush1.msra.mxu0 0.0
    %1024 = vmatprep.subr.mxu0 0.0
    %1025 = vmatpush1.msra.mxu0 0.0
    %1026 = vmatprep.subr.mxu0 0.0
    %1027 = vmatpush1.msra.mxu0 0.0
    %1028 = vmatprep.subr.mxu0 0.0
    %1029 = vmatpush1.msra.mxu0 0.0
    %1030 = vmatprep.subr.mxu0 0.0
    %1031 = vmatpush1.msra.mxu0 0.0
    %1032 = vmatprep.subr.mxu0 0.0
    %1033 = vmatpush1.msra.mxu0 0.0
    %1034 = vmatprep.subr.mxu0 0.0
    %1035 = vmatpush1.msra.mxu0 0.0
    %1036 = vmatprep.subr.mxu0 0.0
    %1037 = vmatpush1.msra.mxu0 0.0
    %1038 = vmatprep.subr.mxu0 0.0
    %1039 = vmatpush1.msra.mxu0 0.0
    %1040 = vmatprep.subr.mxu0 0.0
    %1041 = vmatpush1.msra.mxu0 0.0
    %1042 = vmatprep.subr.mxu0 0.0
    %1043 = vmatpush1.msra.mxu0 0.0
    %1044 = vmatprep.subr.mxu0 0.0
    %1045 = vmatpush1.msra.mxu0 0.0
    %1046 = vmatprep.subr.mxu0 0.0
    %1047 = vmatpush1.msra.mxu0 0.0
    %1048 = vmatprep.subr.mxu0 0.0
    %1049 = vmatpush1.msra.mxu0 0.0
    %1050 = vmatprep.subr.mxu0 0.0
    %1051 = vmatpush1.msra.mxu0 0.0
    %1052 = vmatprep.subr.mxu0 0.0
    %1053 = vmatpush1.msra.mxu0 0.0
    %1054 = vmatprep.subr.mxu0 0.0
    %1055 = vmatpush1.msra.mxu0 0.0
    %1056 = vmatprep.subr.mxu0 0.0
    %1057 = vmatpush1.msra.mxu0 0.0
    %1058 = vmatprep.subr.mxu0 0.0
    %1059 = vmatpush1.msra.mxu0 0.0
    %1060 = vmatprep.subr.mxu0 0.0
    %1061 = vmatpush1.msra.mxu0 0.0
    %1062 = vmatprep.subr.mxu0 0.0
    %1063 = vmatpush1.msra.mxu0 0.0
    %1064 = vmatprep.subr.mxu0 0.0
    %1065 = vmatpush1.msra.mxu0 0.0
    %1066 = vmatprep.subr.mxu0 0.0
    %1067 = vmatpush1.msra.mxu0 0.0
    %1068 = vmatprep.subr.mxu0 0.0
    %1069 = vmatpush1.msra.mxu0 0.0
    %1070 = vmatprep.subr.mxu0 0.0
    %1071 = vmatpush1.msra.mxu0 0.0
    %1072 = vmatprep.subr.mxu0 0.0
    %1073 = vmatpush1.msra.mxu0 0.0
    %1074 = vmatprep.subr.mxu0 0.0
    %1075 = vmatpush1.msra.mxu0 0.0
    %1076 = vmatprep.subr.mxu0 0.0
    %1077 = vmatpush1.msra.mxu0 0.0
    %1078 = vmatprep.subr.mxu0 0.0
    %1079 = vmatpush1.msra.mxu0 0.0
    %1080 = vmatprep.subr.mxu0 0.0
    %1081 = vmatpush1.msra.mxu0 0.0
    %1082 = vmatprep.mubr.f32.mxu0 0.0
    %1083 = vmatmul.mubr.f32.gmra.mrb[0].mxu0 %v803
    %v1084 = vpop.f32.mrb[0].mxu0
    %v1085 = vadd.f32 0.0, %v1084
    %v1086 = vpop.f32.mrb[0].mxu0
    %v1087 = vadd.f32 0.0, %v1086
    %1088 = vdwg.mxu0
    %v1089 = vmul.f32 %v872, %v872
    %v1090 = vmul.f32 %v874, %v874
    %v1091 = vmul.f32 %v943, %v943
    %v1092 = vmul.f32 %v945, %v945
    %v1093 = vmul.f32 %v1014, %v1014
    %v1094 = vmul.f32 %v1016, %v1016
    %v1095 = vmul.f32 %v1085, %v1085
    %v1096 = vmul.f32 %v1087, %v1087
    %v1097 = vadd.f32 %v1089, %v1090
    %v1098 = vadd.f32 %v1097, %v1091
    %v1099 = vadd.f32 %v1098, %v1092
    %v1100 = vadd.f32 %v1099, %v1093
    %v1101 = vadd.f32 %v1100, %v1094
    %v1102 = vadd.f32 %v1101, %v1095
    %v1103 = vadd.f32 %v1102, %v1096
    %1104 = vadd.xlane.f32.xlu0 %v1103
    %v1105 = vpop.xlane.xlu0 %1104
    %v1106 = vadd.f32 %v1105, 1e-16
    %v1107 = vrsqrt.pop %v1106
    %v1108 = vmul.f32 %v872, %v1107
    %v1109 = vmul.f32 %v874, %v1107
    %v1110 = vmul.f32 %v943, %v1107
    %v1111 = vmul.f32 %v945, %v1107
    %v1112 = vmul.f32 %v1014, %v1107
    %v1113 = vmul.f32 %v1016, %v1107
    %v1114 = vmul.f32 %v1085, %v1107
    %v1115 = vmul.f32 %v1087, %v1107
    %1116 = vmatprep.subr.mxu0 0.0
    %1117 = vmatpush1.msra.mxu0 %v35
    %1118 = vmatprep.subr.mxu0 0.0
    %1119 = vmatpush1.msra.mxu0 %v36
    %1120 = vmatprep.subr.mxu0 0.0
    %1121 = vmatpush1.msra.mxu0 %v37
    %1122 = vmatprep.subr.mxu0 0.0
    %1123 = vmatpush1.msra.mxu0 %v38
    %1124 = vmatprep.subr.mxu0 0.0
    %1125 = vmatpush1.msra.mxu0 %v39
    %1126 = vmatprep.subr.mxu0 0.0
    %1127 = vmatpush1.msra.mxu0 %v40
    %1128 = vmatprep.subr.mxu0 0.0
    %1129 = vmatpush1.msra.mxu0 %v41
    %1130 = vmatprep.subr.mxu0 0.0
    %1131 = vmatpush1.msra.mxu0 %v42
    %1132 = vmatprep.subr.mxu0 0.0
    %1133 = vmatpush1.msra.mxu0 %v43
    %1134 = vmatprep.subr.mxu0 0.0
    %1135 = vmatpush1.msra.mxu0 %v44
    %1136 = vmatprep.subr.mxu0 0.0
    %1137 = vmatpush1.msra.mxu0 %v45
    %1138 = vmatprep.subr.mxu0 0.0
    %1139 = vmatpush1.msra.mxu0 %v46
    %1140 = vmatprep.subr.mxu0 0.0
    %1141 = vmatpush1.msra.mxu0 %v47
    %1142 = vmatprep.subr.mxu0 0.0
    %1143 = vmatpush1.msra.mxu0 %v48
    %1144 = vmatprep.subr.mxu0 0.0
    %1145 = vmatpush1.msra.mxu0 %v49
    %1146 = vmatprep.subr.mxu0 0.0
    %1147 = vmatpush1.msra.mxu0 %v50
    %1148 = vmatprep.subr.mxu0 0.0
    %1149 = vmatpush1.msra.mxu0 %v51
    %1150 = vmatprep.subr.mxu0 0.0
    %1151 = vmatpush1.msra.mxu0 %v52
    %1152 = vmatprep.subr.mxu0 0.0
    %1153 = vmatpush1.msra.mxu0 %v53
    %1154 = vmatprep.subr.mxu0 0.0
    %1155 = vmatpush1.msra.mxu0 %v54
    %1156 = vmatprep.subr.mxu0 0.0
    %1157 = vmatpush1.msra.mxu0 %v55
    %1158 = vmatprep.subr.mxu0 0.0
    %1159 = vmatpush1.msra.mxu0 %v56
    %1160 = vmatprep.subr.mxu0 0.0
    %1161 = vmatpush1.msra.mxu0 %v57
    %1162 = vmatprep.subr.mxu0 0.0
    %1163 = vmatpush1.msra.mxu0 %v58
    %1164 = vmatprep.subr.mxu0 0.0
    %1165 = vmatpush1.msra.mxu0 %v59
    %1166 = vmatprep.subr.mxu0 0.0
    %1167 = vmatpush1.msra.mxu0 %v60
    %1168 = vmatprep.subr.mxu0 0.0
    %1169 = vmatpush1.msra.mxu0 %v61
    %1170 = vmatprep.subr.mxu0 0.0
    %1171 = vmatpush1.msra.mxu0 %v62
    %1172 = vmatprep.subr.mxu0 0.0
    %1173 = vmatpush1.msra.mxu0 %v63
    %1174 = vmatprep.subr.mxu0 0.0
    %1175 = vmatpush1.msra.mxu0 %v64
    %1176 = vmatprep.subr.mxu0 0.0
    %1177 = vmatpush1.msra.mxu0 %v65
    %1178 = vmatprep.subr.mxu0 0.0
    %1179 = vmatpush1.msra.mxu0 %v66
    %1180 = vmatprep.mubr.f32.mxu0 %v1109
    %1181 = vmatmul.mubr.f32.gmra.mrb[0].mxu0 %v1108
    %v1182 = vpop.f32.mrb[0].mxu0
    %v1183 = vadd.f32 0.0, %v1182
    %v1184 = vpop.f32.mrb[0].mxu0
    %1185 = vdwg.mxu0
    %1186 = vmatprep.subr.mxu0 0.0
    %1187 = vmatpush1.msra.mxu0 %v67
    %1188 = vmatprep.subr.mxu0 0.0
    %1189 = vmatpush1.msra.mxu0 %v68
    %1190 = vmatprep.subr.mxu0 0.0
    %1191 = vmatpush1.msra.mxu0 %v69
    %1192 = vmatprep.subr.mxu0 0.0
    %1193 = vmatpush1.msra.mxu0 %v70
    %1194 = vmatprep.subr.mxu0 0.0
    %1195 = vmatpush1.msra.mxu0 %v71
    %1196 = vmatprep.subr.mxu0 0.0
    %1197 = vmatpush1.msra.mxu0 %v72
    %1198 = vmatprep.subr.mxu0 0.0
    %1199 = vmatpush1.msra.mxu0 %v73
    %1200 = vmatprep.subr.mxu0 0.0
    %1201 = vmatpush1.msra.mxu0 %v74
    %1202 = vmatprep.subr.mxu0 0.0
    %1203 = vmatpush1.msra.mxu0 %v75
    %1204 = vmatprep.subr.mxu0 0.0
    %1205 = vmatpush1.msra.mxu0 %v76
    %1206 = vmatprep.subr.mxu0 0.0
    %1207 = vmatpush1.msra.mxu0 %v77
    %1208 = vmatprep.subr.mxu0 0.0
    %1209 = vmatpush1.msra.mxu0 %v78
    %1210 = vmatprep.subr.mxu0 0.0
    %1211 = vmatpush1.msra.mxu0 %v79
    %1212 = vmatprep.subr.mxu0 0.0
    %1213 = vmatpush1.msra.mxu0 %v80
    %1214 = vmatprep.subr.mxu0 0.0
    %1215 = vmatpush1.msra.mxu0 %v81
    %1216 = vmatprep.subr.mxu0 0.0
    %1217 = vmatpush1.msra.mxu0 %v82
    %1218 = vmatprep.subr.mxu0 0.0
    %1219 = vmatpush1.msra.mxu0 %v83
    %1220 = vmatprep.subr.mxu0 0.0
    %1221 = vmatpush1.msra.mxu0 %v84
    %1222 = vmatprep.subr.mxu0 0.0
    %1223 = vmatpush1.msra.mxu0 %v85
    %1224 = vmatprep.subr.mxu0 0.0
    %1225 = vmatpush1.msra.mxu0 %v86
    %1226 = vmatprep.subr.mxu0 0.0
    %1227 = vmatpush1.msra.mxu0 %v87
    %1228 = vmatprep.subr.mxu0 0.0
    %1229 = vmatpush1.msra.mxu0 %v88
    %1230 = vmatprep.subr.mxu0 0.0
    %1231 = vmatpush1.msra.mxu0 %v89
    %1232 = vmatprep.subr.mxu0 0.0
    %1233 = vmatpush1.msra.mxu0 %v90
    %1234 = vmatprep.subr.mxu0 0.0
    %1235 = vmatpush1.msra.mxu0 %v91
    %1236 = vmatprep.subr.mxu0 0.0
    %1237 = vmatpush1.msra.mxu0 %v92
    %1238 = vmatprep.subr.mxu0 0.0
    %1239 = vmatpush1.msra.mxu0 %v93
    %1240 = vmatprep.subr.mxu0 0.0
    %1241 = vmatpush1.msra.mxu0 %v94
    %1242 = vmatprep.subr.mxu0 0.0
    %1243 = vmatpush1.msra.mxu0 %v95
    %1244 = vmatprep.subr.mxu0 0.0
    %1245 = vmatpush1.msra.mxu0 %v96
    %1246 = vmatprep.subr.mxu0 0.0
    %1247 = vmatpush1.msra.mxu0 %v97
    %1248 = vmatprep.subr.mxu0 0.0
    %1249 = vmatpush1.msra.mxu0 %v98
    %1250 = vmatprep.mubr.f32.mxu0 %v1111
    %1251 = vmatmul.mubr.f32.gmra.mrb[0].mxu0 %v1110
    %v1252 = vpop.f32.mrb[0].mxu0
    %v1253 = vadd.f32 %v1183, %v1252
    %v1254 = vpop.f32.mrb[0].mxu0
    %1255 = vdwg.mxu0
    %1256 = vmatprep.subr.mxu0 0.0
    %1257 = vmatpush1.msra.mxu0 %v99
    %1258 = vmatprep.subr.mxu0 0.0
    %1259 = vmatpush1.msra.mxu0 %v100
    %1260 = vmatprep.subr.mxu0 0.0
    %1261 = vmatpush1.msra.mxu0 %v101
    %1262 = vmatprep.subr.mxu0 0.0
    %1263 = vmatpush1.msra.mxu0 %v102
    %1264 = vmatprep.subr.mxu0 0.0
    %1265 = vmatpush1.msra.mxu0 %v103
    %1266 = vmatprep.subr.mxu0 0.0
    %1267 = vmatpush1.msra.mxu0 %v104
    %1268 = vmatprep.subr.mxu0 0.0
    %1269 = vmatpush1.msra.mxu0 %v105
    %1270 = vmatprep.subr.mxu0 0.0
    %1271 = vmatpush1.msra.mxu0 %v106
    %1272 = vmatprep.subr.mxu0 0.0
    %1273 = vmatpush1.msra.mxu0 %v107
    %1274 = vmatprep.subr.mxu0 0.0
    %1275 = vmatpush1.msra.mxu0 %v108
    %1276 = vmatprep.subr.mxu0 0.0
    %1277 = vmatpush1.msra.mxu0 %v109
    %1278 = vmatprep.subr.mxu0 0.0
    %1279 = vmatpush1.msra.mxu0 %v110
    %1280 = vmatprep.subr.mxu0 0.0
    %1281 = vmatpush1.msra.mxu0 %v111
    %1282 = vmatprep.subr.mxu0 0.0
    %1283 = vmatpush1.msra.mxu0 %v112
    %1284 = vmatprep.subr.mxu0 0.0
    %1285 = vmatpush1.msra.mxu0 %v113
    %1286 = vmatprep.subr.mxu0 0.0
    %1287 = vmatpush1.msra.mxu0 %v114
    %1288 = vmatprep.subr.mxu0 0.0
    %1289 = vmatpush1.msra.mxu0 %v115
    %1290 = vmatprep.subr.mxu0 0.0
    %1291 = vmatpush1.msra.mxu0 %v116
    %1292 = vmatprep.subr.mxu0 0.0
    %1293 = vmatpush1.msra.mxu0 %v117
    %1294 = vmatprep.subr.mxu0 0.0
    %1295 = vmatpush1.msra.mxu0 %v118
    %1296 = vmatprep.subr.mxu0 0.0
    %1297 = vmatpush1.msra.mxu0 %v119
    %1298 = vmatprep.subr.mxu0 0.0
    %1299 = vmatpush1.msra.mxu0 %v120
    %1300 = vmatprep.subr.mxu0 0.0
    %1301 = vmatpush1.msra.mxu0 %v121
    %1302 = vmatprep.subr.mxu0 0.0
    %1303 = vmatpush1.msra.mxu0 %v122
    %1304 = vmatprep.subr.mxu0 0.0
    %1305 = vmatpush1.msra.mxu0 %v123
    %1306 = vmatprep.subr.mxu0 0.0
    %1307 = vmatpush1.msra.mxu0 %v124
    %1308 = vmatprep.subr.mxu0 0.0
    %1309 = vmatpush1.msra.mxu0 %v125
    %1310 = vmatprep.subr.mxu0 0.0
    %1311 = vmatpush1.msra.mxu0 %v126
    %1312 = vmatprep.subr.mxu0 0.0
    %1313 = vmatpush1.msra.mxu0 %v127
    %1314 = vmatprep.subr.mxu0 0.0
    %1315 = vmatpush1.msra.mxu0 %v128
    %1316 = vmatprep.subr.mxu0 0.0
    %1317 = vmatpush1.msra.mxu0 %v129
    %1318 = vmatprep.subr.mxu0 0.0
    %1319 = vmatpush1.msra.mxu0 %v130
    %1320 = vmatprep.mubr.f32.mxu0 %v1113
    %1321 = vmatmul.mubr.f32.gmra.mrb[0].mxu0 %v1112
    %v1322 = vpop.f32.mrb[0].mxu0
    %v1323 = vadd.f32 %v1253, %v1322
    %v1324 = vpop.f32.mrb[0].mxu0
    %1325 = vdwg.mxu0
    %1326 = vmatprep.subr.mxu0 0.0
    %1327 = vmatpush1.msra.mxu0 %v131
    %1328 = vmatprep.subr.mxu0 0.0
    %1329 = vmatpush1.msra.mxu0 %v132
    %1330 = vmatprep.subr.mxu0 0.0
    %1331 = vmatpush1.msra.mxu0 %v133
    %1332 = vmatprep.subr.mxu0 0.0
    %1333 = vmatpush1.msra.mxu0 %v134
    %1334 = vmatprep.subr.mxu0 0.0
    %1335 = vmatpush1.msra.mxu0 %v135
    %1336 = vmatprep.subr.mxu0 0.0
    %1337 = vmatpush1.msra.mxu0 %v136
    %1338 = vmatprep.subr.mxu0 0.0
    %1339 = vmatpush1.msra.mxu0 %v137
    %1340 = vmatprep.subr.mxu0 0.0
    %1341 = vmatpush1.msra.mxu0 %v138
    %1342 = vmatprep.subr.mxu0 0.0
    %1343 = vmatpush1.msra.mxu0 %v139
    %1344 = vmatprep.subr.mxu0 0.0
    %1345 = vmatpush1.msra.mxu0 %v140
    %1346 = vmatprep.subr.mxu0 0.0
    %1347 = vmatpush1.msra.mxu0 %v141
    %1348 = vmatprep.subr.mxu0 0.0
    %1349 = vmatpush1.msra.mxu0 %v142
    %1350 = vmatprep.subr.mxu0 0.0
    %1351 = vmatpush1.msra.mxu0 %v143
    %1352 = vmatprep.subr.mxu0 0.0
    %1353 = vmatpush1.msra.mxu0 %v144
    %1354 = vmatprep.subr.mxu0 0.0
    %1355 = vmatpush1.msra.mxu0 %v145
    %1356 = vmatprep.subr.mxu0 0.0
    %1357 = vmatpush1.msra.mxu0 %v146
    %1358 = vmatprep.subr.mxu0 0.0
    %1359 = vmatpush1.msra.mxu0 %v147
    %1360 = vmatprep.subr.mxu0 0.0
    %1361 = vmatpush1.msra.mxu0 %v148
    %1362 = vmatprep.subr.mxu0 0.0
    %1363 = vmatpush1.msra.mxu0 %v149
    %1364 = vmatprep.subr.mxu0 0.0
    %1365 = vmatpush1.msra.mxu0 %v150
    %1366 = vmatprep.subr.mxu0 0.0
    %1367 = vmatpush1.msra.mxu0 %v151
    %1368 = vmatprep.subr.mxu0 0.0
    %1369 = vmatpush1.msra.mxu0 %v152
    %1370 = vmatprep.subr.mxu0 0.0
    %1371 = vmatpush1.msra.mxu0 %v153
    %1372 = vmatprep.subr.mxu0 0.0
    %1373 = vmatpush1.msra.mxu0 %v154
    %1374 = vmatprep.subr.mxu0 0.0
    %1375 = vmatpush1.msra.mxu0 %v155
    %1376 = vmatprep.subr.mxu0 0.0
    %1377 = vmatpush1.msra.mxu0 %v156
    %1378 = vmatprep.subr.mxu0 0.0
    %1379 = vmatpush1.msra.mxu0 %v157
    %1380 = vmatprep.subr.mxu0 0.0
    %1381 = vmatpush1.msra.mxu0 %v158
    %1382 = vmatprep.subr.mxu0 0.0
    %1383 = vmatpush1.msra.mxu0 %v159
    %1384 = vmatprep.subr.mxu0 0.0
    %1385 = vmatpush1.msra.mxu0 %v160
    %1386 = vmatprep.subr.mxu0 0.0
    %1387 = vmatpush1.msra.mxu0 %v161
    %1388 = vmatprep.subr.mxu0 0.0
    %1389 = vmatpush1.msra.mxu0 %v162
    %1390 = vmatprep.mubr.f32.mxu0 %v1115
    %1391 = vmatmul.mubr.f32.gmra.mrb[0].mxu0 %v1114
    %v1392 = vpop.f32.mrb[0].mxu0
    %v1393 = vadd.f32 %v1323, %v1392
    %v1394 = vpop.f32.mrb[0].mxu0
    %1395 = vdwg.mxu0
    %v1396 = vmul.f32 %v1393, 10.0
    %v1397 = vadd.f32 %v455, %v1396
    %v1398 = vsel %vm458, %v1397, -inf
    %1399 = vmax.xlane.f32.xlu0 %v1398
    %v1400 = vpop.xlane.xlu0 %1399
    %v1401 = vsub.f32 %v1397, %v1400
    %v1402 = vmul.f32 %v1401, 1.442695
    %v1403 = vpow.pop %v1402
    %v1404 = vsel %vm458, %v1403, 0.0
    %1405 = vadd.xlane.f32.xlu0 %v1404
    %v1406 = vpop.xlane.xlu0 %1405
    %v1407 = vlog2.pop %v1406
    %v1408 = vmul.f32 %v1407, 0.6931472
    %v1409 = vsub.f32 %v1401, %v1408
    %v1410 = vsub.f32 %v472, %v1409
    %v1411 = vmul.f32 %v469, %v1410
    %v1412 = vsel %vm458, %v1411, 0.0
    %1413 = vadd.xlane.f32.xlu0 %v1412
    %v1414 = vpop.xlane.xlu0 %1413
    %v1415 = vld [vmem:[#allocation2] sm:$0x1]
    %v1416 = vrot.slane %v1414, 4
    %v1417 = vadd.f32 %v1414, %v1416
    %v1418 = vrot.slane %v1417, 2
    %v1419 = vadd.f32 %v1417, %v1418
    %v1420 = vrot.slane %v1419, 1
    %v1421 = vadd.f32 %v1419, %v1420
    %v1422 = vmul.f32 %v1421, 0.5
    %v1423 = vadd.f32 %v1415, %v1422
    %vm1424 = vcmask 0
    %1425 = vst.msk [vmem:[#allocation2] sm:$0x1] %vm1424, %v1423
    // Predicated region
    $region26: #{tpu_custom_call.1} parent=1 // pred_check
      _
    $region27: #{tpu_custom_call.1} parent=1 // pred_check_branch
      %1427 = sbr.rel (0) target = $region29
    $region28: #{tpu_custom_call.1} parent=1 // pred_region
      %s1429 = ssub.s32 16, 16
      %1430 = vsyncadd [#allocation3], %s1429
      %s1432 = sshll.u32 [#allocation2], 4
      %s1433 = int_to_ptr.vmem [resolvable:$true] %s1432
      %1435 = dma.vmem_to_hbm [thread:$0]  %s1433, 16, %s5, [#allocation3]
    $region29: #{tpu_custom_call.1} parent=1 // pred_fallthru
      _
    // Predicated region
    $region30: #{tpu_custom_call.1} parent=1 // pred_check
      _
    $region31: #{tpu_custom_call.1} parent=1 // pred_check_branch
      %1437 = sbr.rel (0) target = $region33
    $region32: #{tpu_custom_call.1} parent=1 // pred_region
      %1438 = dma.done [#allocation3], 16
    $region33: #{tpu_custom_call.1} parent=1 // pred_fallthru
      _
    %1439 = vsyncpa [#allocation3], 1

</llo_original>
